<compile_context>
chip_gen: v5e
topology: v5e:2x2
jax: 0.10.0
libtpu: 0.0.40
codegen_flags: <defaults>
</compile_context>

<pallas_src>
import warnings

import jax
import jax.numpy as jnp
from jax.experimental import pallas as pl
from jax.experimental.pallas import tpu as pltpu


# ---------------------------------------------------------------------------
# Kernel bodies
# ---------------------------------------------------------------------------

def _plastic_rnn_kernel_flat(x_ref, h_ref, hebb_ref,
                             wi_ref, bi_ref, w_ref,
                             hrep_ref, srep_ref, salpha_ref,
                             hw_ref, hb_ref, eta_ref,
                             out_ref, hnew_ref, hebb_new_ref):
    """Small-H path: hebb stays flat (TB, H*H) -> every load/store on the
    dominant tensor is lane-dense.  The (i, j) structure is recovered with
    small 0/1 replication / alpha-weighted segment-sum matmuls on the MXU."""
    x = x_ref[...]                        # (TB, I)
    h = h_ref[...]                        # (TB, H)
    hebb = hebb_ref[...]                  # (TB, H*H)  lane-dense
    eta = eta_ref[0]                      # SMEM scalar

    # i2h(inputs) and the shared recurrent part: MXU with M = TB.
    i2h = jnp.dot(x, wi_ref[...], preferred_element_type=jnp.float32) + bi_ref[...]
    rec_w = jnp.dot(h, w_ref[...], preferred_element_type=jnp.float32)

    # h_rep[b, i*H+j] = h[b, j]  (lane replication via a 0/1 matmul, MXU).
    h_rep = jnp.dot(h, hrep_ref[...], preferred_element_type=jnp.float32)
    # rec_p[b, i] = sum_j alpha[i, j] * hebb[b, i, j] * h[b, j]
    #            = (hebb_flat * h_rep) @ S_alpha   (dense VPU mult + MXU).
    rec_p = jnp.dot(hebb * h_rep, salpha_ref[...],
                    preferred_element_type=jnp.float32)

    hact = jnp.tanh(i2h + rec_w + rec_p)               # (TB, H), tanh on EUP
    hnew_ref[...] = hact

    # Fused (h2o | h2v | zero-pad) head -> single lane-dense (TB, OF) store.
    out_ref[...] = jnp.dot(hact, hw_ref[...],
                           preferred_element_type=jnp.float32) + hb_ref[...]

    # Hebbian update, flat and lane-dense; eta folded into hact before the
    # replication so there is no extra full-size multiply.
    s_rep = jnp.dot(eta * hact, srep_ref[...], preferred_element_type=jnp.float32)
    hebb_new_ref[...] = jnp.clip(hebb + s_rep * h_rep, -1.0, 1.0)


def _plastic_rnn_kernel_rows(x_ref, h_ref, hebb_ref,
                             wi_ref, bi_ref, w_ref, alpha_ref,
                             hw_ref, hb_ref, eta_ref,
                             out_ref, hnew_ref, hebb_new_ref,
                             acc_ref):
    """Large-H path: grid = (batch tiles, H-row chunks).  Each step touches a
    (TB, TH, H) slab of hebb so double-buffered DMA fits in VMEM for big H;
    the fused head output is accumulated over row chunks in VMEM scratch."""
    r = pl.program_id(1)

    @pl.when(r == 0)
    def _():
        acc_ref[...] = jnp.zeros_like(acc_ref)

    x = x_ref[...]                        # (TB, I)
    h = h_ref[...]                        # (TB, H)  full hidden (needed for j)
    hebb = hebb_ref[...]                  # (TB, TH, H)
    eta = eta_ref[0]                      # SMEM scalar

    i2h = jnp.dot(x, wi_ref[...], preferred_element_type=jnp.float32) + bi_ref[...]
    rec_w = jnp.dot(h, w_ref[...], preferred_element_type=jnp.float32)
    rec_p = jnp.sum(alpha_ref[...][None, :, :] * hebb * h[:, None, :], axis=-1)

    hact = jnp.tanh(i2h + rec_w + rec_p)               # (TB, TH)
    hnew_ref[...] = hact

    acc_ref[...] += jnp.dot(hact, hw_ref[...], preferred_element_type=jnp.float32)
    out_ref[...] = acc_ref[...] + hb_ref[...]          # final chunk's write wins

    # Hebbian update for this row chunk; eta folded into hact (no extra
    # full-size (TB, TH, H) multiply).
    hebb_new_ref[...] = jnp.clip(
        hebb + (eta * hact)[:, :, None] * h[:, None, :], -1.0, 1.0)


# ---------------------------------------------------------------------------
# Tiling heuristics
# ---------------------------------------------------------------------------

def _sum_block_bytes(block_shapes, itemsize=4):
    total = 0
    for s in block_shapes:
        n = 1
        for d in s:
            n *= d
        total += n * itemsize
    return total


def _pick_batch_tile(B, per_sample_bytes, target_tile_bytes):
    """Largest batch tile that divides B, preferring (a) sublane-aligned
    (multiple of 8) tiles, (b) >= 2 grid steps along the 'parallel' batch axis
    so both v7x TensorCores get work, (c) a per-step hebb slab <= target."""
    divisors = [d for d in range(1, B + 1) if B % d == 0]
    for need_mult8, need_two_steps in ((True, True), (True, False),
                                       (False, True), (False, False)):
        cands = [d for d in divisors
                 if (not need_mult8 or d % 8 == 0)
                 and (not need_two_steps or d < B or B == 1)
                 and d * per_sample_bytes <= target_tile_bytes]
        if cands:
            return max(cands)
    return 1


def _pick_row_tile(H, target_tile_bytes, nominal_tb=8):
    if H % 128 != 0:
        # TODO(synk): for large H that is not a multiple of 128, pad H (or use
        # a flat/segment-matmul layout) so the hebb stream stays lane-dense.
        return H
    th = 128
    while H % (th * 2) == 0 and nominal_tb * (th * 2) * H * 4 <= target_tile_bytes:
        th *= 2
    return th


# ---------------------------------------------------------------------------
# Wrapper
# ---------------------------------------------------------------------------

def plastic_rnn_step(inputs, hidden, hebb, wi, bi, w, alpha, eta,
                     wo, bo, wv, bv, *, batch_tile=None, row_tile=None,
                     target_tile_bytes=4 * 1024 * 1024):
    """One forward step of Plastic_NonModulated_RNN (same math as the PyTorch
    module).  inputs: (B, I); hidden: (B, H); hebb: (B, H, H).  Weights use
    PyTorch (out, in) convention.  Returns (activout (B, O), valueout (B, 1),
    (hidden_new (B, H), hebb_new (B, H, H))).

    hebb should be donated by the caller's jit (donate_argnums); it is aliased
    to hebb_new via input_output_aliases so the dominant tensor is updated in
    place in HBM."""
    inputs = inputs.astype(jnp.float32)
    hidden = hidden.astype(jnp.float32)
    hebb = hebb.astype(jnp.float32)

    B, I = inputs.shape
    H = hidden.shape[1]
    O = wo.shape[0]
    OF = pl.cdiv(O + 1, 128) * 128        # lane-dense fused (h2o | h2v) head

    # Layout plumbing stays in the wrapper.
    wi_t = wi.T.astype(jnp.float32)                              # (I, H)
    w_t = w.T.astype(jnp.float32)                                # (H, H)
    bi2 = bi.reshape(1, H).astype(jnp.float32)
    head_w = jnp.concatenate([wo.T, wv.T], axis=1).astype(jnp.float32)  # (H, O+1)
    head_b = jnp.concatenate([bo, bv]).reshape(1, O + 1).astype(jnp.float32)
    pad = OF - (O + 1)
    if pad:
        head_w = jnp.pad(head_w, ((0, 0), (0, pad)))
        head_b = jnp.pad(head_b, ((0, 0), (0, pad)))
    eta1 = eta.reshape(1).astype(jnp.float32)

    # Small H (not a multiple of 128): flat lane-dense hebb path.  The helper
    # matrices are O(H^3) so only use this when they are tiny.
    use_flat = (H % 128 != 0) and (H * H * H * 4 <= 2 * 1024 * 1024)

    if use_flat:
        HH = H * H
        TB = batch_tile if batch_tile is not None else _pick_batch_tile(
            B, HH * 4, target_tile_bytes)
        assert B % TB == 0, f"batch {B} must be divisible by batch tile {TB}"

        k = jnp.arange(HH)
        i_idx = k // H
        j_idx = k % H
        rng = jnp.arange(H)
        # h_rep = h @ rep_h          with rep_h[j, i*H+j] = 1
        rep_h = (rng[:, None] == j_idx[None, :]).astype(jnp.float32)       # (H, HH)
        # s_rep = (eta*hact) @ rep_s with rep_s[i, i*H+j] = 1
        rep_s = (rng[:, None] == i_idx[None, :]).astype(jnp.float32)       # (H, HH)
        # rec_p = (hebb*h_rep) @ seg_alpha, seg_alpha[i*H+j, i'] = alpha[i,j]*(i==i')
        seg_alpha = ((i_idx[:, None] == rng[None, :]).astype(jnp.float32)
                     * alpha.reshape(HH, 1).astype(jnp.float32))            # (HH, H)

        hebb_flat = hebb.reshape(B, HH)

        per_b = lambda cols: pl.BlockSpec((TB, cols), lambda b: (b, 0))
        full = lambda r_, c_: pl.BlockSpec((r_, c_), lambda b: (0, 0))

        in_specs = [
            per_b(I), per_b(H), per_b(HH),
            full(I, H), full(1, H), full(H, H),
            full(H, HH), full(H, HH), full(HH, H),
            full(H, OF), full(1, OF),
            pl.BlockSpec(memory_space=pltpu.MemorySpace.SMEM),               # eta
        ]
        out_specs = (per_b(OF), per_b(H), per_b(HH))
        out_shape = (
            jax.ShapeDtypeStruct((B, OF), jnp.float32),
            jax.ShapeDtypeStruct((B, H), jnp.float32),
            jax.ShapeDtypeStruct((B, HH), jnp.float32),
        )
        blocks = [(TB, I), (TB, H), (TB, HH), (I, H), (1, H), (H, H),
                  (H, HH), (H, HH), (HH, H), (H, OF), (1, OF),
                  (TB, OF), (TB, H), (TB, HH)]
        vmem_limit = int(min(48 << 20,
                             max(32 << 20, 2 * _sum_block_bytes(blocks) + (2 << 20))))

        head_out, hnew, hebb_new_flat = pl.pallas_call(
            _plastic_rnn_kernel_flat,
            out_shape=out_shape,
            grid=(B // TB,),
            in_specs=in_specs,
            out_specs=out_specs,
            input_output_aliases={2: 2},     # hebb -> hebb_new, in place in HBM
            compiler_params=pltpu.CompilerParams(
                dimension_semantics=("parallel",),
                vmem_limit_bytes=vmem_limit),
        )(inputs, hidden, hebb_flat, wi_t, bi2, w_t,
          rep_h, rep_s, seg_alpha, head_w, head_b, eta1)
        hebb_new = hebb_new_flat.reshape(B, H, H)

    else:
        TH = row_tile if row_tile is not None else _pick_row_tile(
            H, target_tile_bytes)
        assert H % TH == 0, f"hidden {H} must be divisible by row tile {TH}"
        TB = batch_tile if batch_tile is not None else _pick_batch_tile(
            B, TH * H * 4, target_tile_bytes)
        assert B % TB == 0, f"batch {B} must be divisible by batch tile {TB}"

        in_specs = [
            pl.BlockSpec((TB, I), lambda b, r: (b, 0)),          # inputs
            pl.BlockSpec((TB, H), lambda b, r: (b, 0)),          # hidden (full)
            pl.BlockSpec((TB, TH, H), lambda b, r: (b, r, 0)),   # hebb row chunk
            pl.BlockSpec((I, TH), lambda b, r: (0, r)),          # wi.T cols
            pl.BlockSpec((1, TH), lambda b, r: (0, r)),          # i2h bias cols
            pl.BlockSpec((H, TH), lambda b, r: (0, r)),          # w.T cols
            pl.BlockSpec((TH, H), lambda b, r: (r, 0)),          # alpha rows
            pl.BlockSpec((TH, OF), lambda b, r: (r, 0)),         # head weight rows
            pl.BlockSpec((1, OF), lambda b, r: (0, 0)),          # head bias
            pl.BlockSpec(memory_space=pltpu.MemorySpace.SMEM),   # eta
        ]
        out_specs = (
            pl.BlockSpec((TB, OF), lambda b, r: (b, 0)),         # fused head (acc)
            pl.BlockSpec((TB, TH), lambda b, r: (b, r)),         # new hidden chunk
            pl.BlockSpec((TB, TH, H), lambda b, r: (b, r, 0)),   # new hebb chunk
        )
        out_shape = (
            jax.ShapeDtypeStruct((B, OF), jnp.float32),
            jax.ShapeDtypeStruct((B, H), jnp.float32),
            jax.ShapeDtypeStruct((B, H, H), jnp.float32),
        )
        blocks = [(TB, I), (TB, H), (TB, TH, H), (I, TH), (1, TH), (H, TH),
                  (TH, H), (TH, OF), (1, OF),
                  (TB, OF), (TB, TH), (TB, TH, H), (TB, OF)]
        vmem_limit = int(min(48 << 20,
                             max(32 << 20, 2 * _sum_block_bytes(blocks) + (2 << 20))))

        head_out, hnew, hebb_new = pl.pallas_call(
            _plastic_rnn_kernel_rows,
            out_shape=out_shape,
            grid=(B // TB, H // TH),
            in_specs=in_specs,
            out_specs=out_specs,
            scratch_shapes=[pltpu.VMEM((TB, OF), jnp.float32)],
            input_output_aliases={2: 2},
            compiler_params=pltpu.CompilerParams(
                dimension_semantics=("parallel", "arbitrary"),
                vmem_limit_bytes=vmem_limit),
        )(inputs, hidden, hebb, wi_t, bi2, w_t, alpha.astype(jnp.float32),
          head_w, head_b, eta1)

    activout = head_out[:, :O]
    valueout = head_out[:, O:O + 1]
    return activout, valueout, (hnew, hebb_new)


# ---------------------------------------------------------------------------
# Pure-JAX reference (matches the PyTorch semantics)
# ---------------------------------------------------------------------------

def ref_forward(inputs, hidden, hebb, wi, bi, w, alpha, eta, wo, bo, wv, bv):
    i2h = inputs @ wi.T + bi
    w_eff = w[None] + alpha[None] * hebb
    rec = jnp.einsum('bij,bj->bi', w_eff, hidden)
    hactiv = jnp.tanh(i2h + rec)
    activout = hactiv @ wo.T + bo
    valueout = hactiv @ wv.T + bv
    delta = jnp.einsum('bi,bj->bij', hactiv, hidden)
    hebb_new = jnp.clip(hebb + eta * delta, -1.0, 1.0)
    return activout, valueout, hactiv, hebb_new


if __name__ == "__main__":
    # If XLA cannot honor donation it falls back to a copy (correct, slower);
    # silence only that advisory so the run stays clean.
    warnings.filterwarnings("ignore",
                            message="Some donated buffers were not usable")

    step = jax.jit(plastic_rnn_step, donate_argnums=(2,),
                   static_argnames=("batch_tile", "row_tile"))

    def run_case(seed, B, I, H, O, **kw):
        ks = jax.random.split(jax.random.PRNGKey(seed), 11)
        wi = 0.1 * jax.random.normal(ks[0], (H, I), jnp.float32)      # i2h.weight
        bi = 0.1 * jax.random.normal(ks[1], (H,), jnp.float32)        # i2h.bias
        w = 0.01 * jax.random.uniform(ks[2], (H, H), jnp.float32)     # self.w
        alpha = 0.01 * jax.random.uniform(ks[3], (H, H), jnp.float32) # self.alpha
        eta = jnp.full((1,), 0.1, jnp.float32)                        # self.eta
        wo = 0.1 * jax.random.normal(ks[4], (O, H), jnp.float32)      # h2o.weight
        bo = 0.1 * jax.random.normal(ks[5], (O,), jnp.float32)        # h2o.bias
        wv = 0.1 * jax.random.normal(ks[6], (1, H), jnp.float32)      # h2v.weight
        bv = 0.1 * jax.random.normal(ks[7], (1,), jnp.float32)        # h2v.bias
        inputs = jax.random.normal(ks[8], (B, I), jnp.float32)
        hidden = jax.random.normal(ks[9], (B, H), jnp.float32)
        hebb = jax.random.uniform(ks[10], (B, H, H), jnp.float32,
                                  minval=-0.5, maxval=0.5)

        # Reference FIRST: hebb is donated to (and clobbered by) the kernel call.
        r_act, r_val, r_hid, r_hebb = ref_forward(
            inputs, hidden, hebb, wi, bi, w, alpha, eta, wo, bo, wv, bv)
        jax.block_until_ready((r_act, r_val, r_hid, r_hebb))

        act, val, (hid, hebb_new) = step(
            inputs, hidden, hebb, wi, bi, w, alpha, eta, wo, bo, wv, bv, **kw)
        jax.block_until_ready((act, val, hid, hebb_new))

        assert act.shape == (B, O) and val.shape == (B, 1)
        assert hid.shape == (B, H) and hebb_new.shape == (B, H, H)
        # Tolerance accounts for the MXU's default (bf16-pass) f32 matmul
        # precision differing between the kernel and the XLA reference.
        tol = dict(atol=2e-2, rtol=2e-2)
        assert jnp.allclose(act, r_act, **tol), "activout mismatch"
        assert jnp.allclose(val, r_val, **tol), "valueout mismatch"
        assert jnp.allclose(hid, r_hid, **tol), "hidden mismatch"
        assert jnp.allclose(hebb_new, r_hebb, **tol), "hebb mismatch"

    # Small hidden size (H=32 < 128): flat lane-dense hebb path; batch tiles of
    # 8 give a grid of (2,) so both v7x TensorCores get a tile.
    run_case(0, B=16, I=16, H=32, O=8)
    # Production-style hidden size (H=256, multiple of 128): 3-D path with the
    # H-row-chunk "arbitrary" grid axis (grid (2, 2)) and fused-head
    # accumulation in VMEM scratch.
    run_case(1, B=16, I=16, H=256, O=8, row_tile=128)

    print("KERNEL_OK")
</pallas_src>

<mosaic_0001>
module attributes {stable_mosaic.version = 11 : i64} {
  func.func @_plastic_rnn_kernel_flat(%arg0: i32, %arg1: memref<8x16xf32, #tpu.memory_space<vmem>>, %arg2: memref<8x32xf32, #tpu.memory_space<vmem>>, %arg3: memref<8x1024xf32, #tpu.memory_space<vmem>>, %arg4: memref<16x32xf32, #tpu.memory_space<vmem>>, %arg5: memref<1x32xf32, #tpu.memory_space<vmem>>, %arg6: memref<32x32xf32, #tpu.memory_space<vmem>>, %arg7: memref<32x1024xf32, #tpu.memory_space<vmem>>, %arg8: memref<32x1024xf32, #tpu.memory_space<vmem>>, %arg9: memref<1024x32xf32, #tpu.memory_space<vmem>>, %arg10: memref<32x128xf32, #tpu.memory_space<vmem>>, %arg11: memref<1x128xf32, #tpu.memory_space<vmem>>, %arg12: memref<1xf32, #tpu.memory_space<smem>>, %arg13: memref<8x128xf32, #tpu.memory_space<vmem>>, %arg14: memref<8x32xf32, #tpu.memory_space<vmem>>, %arg15: memref<8x1024xf32, #tpu.memory_space<vmem>>) attributes {dimension_semantics = [#tpu.dimension_semantics<parallel>], iteration_bounds = array<i64: 2>, scalar_prefetch = 0 : i64, scratch_operands = 0 : i64, tpu.core_type = #tpu.core_type<tc>, window_params = [{transform_indices = @transform_0, window_bounds = array<i64: 8, 16>}, {transform_indices = @transform_1, window_bounds = array<i64: 8, 32>}, {transform_indices = @transform_2, window_bounds = array<i64: 8, 1024>}, {pipeline_mode = #tpu.pipeline_mode<synchronous>, transform_indices = @transform_3, window_bounds = array<i64: 16, 32>}, {pipeline_mode = #tpu.pipeline_mode<synchronous>, transform_indices = @transform_4, window_bounds = array<i64: 1, 32>}, {pipeline_mode = #tpu.pipeline_mode<synchronous>, transform_indices = @transform_5, window_bounds = array<i64: 32, 32>}, {pipeline_mode = #tpu.pipeline_mode<synchronous>, transform_indices = @transform_6, window_bounds = array<i64: 32, 1024>}, {pipeline_mode = #tpu.pipeline_mode<synchronous>, transform_indices = @transform_7, window_bounds = array<i64: 32, 1024>}, {pipeline_mode = #tpu.pipeline_mode<synchronous>, transform_indices = @transform_8, window_bounds = array<i64: 1024, 32>}, {pipeline_mode = #tpu.pipeline_mode<synchronous>, transform_indices = @transform_9, window_bounds = array<i64: 32, 128>}, {pipeline_mode = #tpu.pipeline_mode<synchronous>, transform_indices = @transform_10, window_bounds = array<i64: 1, 128>}, {transform_indices = @transform_11, window_bounds = array<i64: 1>}, {transform_indices = @transform_12, window_bounds = array<i64: 8, 128>}, {transform_indices = @transform_13, window_bounds = array<i64: 8, 32>}, {transform_indices = @transform_14, window_bounds = array<i64: 8, 1024>}]} {
    %c0 = arith.constant 0 : index
    %c0_0 = arith.constant 0 : index
    %0 = vector.load %arg1[%c0, %c0_0] : memref<8x16xf32, #tpu.memory_space<vmem>>, vector<8x16xf32>
    %c0_1 = arith.constant 0 : index
    %c0_2 = arith.constant 0 : index
    %1 = vector.load %arg2[%c0_1, %c0_2] : memref<8x32xf32, #tpu.memory_space<vmem>>, vector<8x32xf32>
    %c0_3 = arith.constant 0 : index
    %c0_4 = arith.constant 0 : index
    %2 = vector.load %arg3[%c0_3, %c0_4] : memref<8x1024xf32, #tpu.memory_space<vmem>>, vector<8x1024xf32>
    %c0_5 = arith.constant 0 : index
    %3 = memref.load %arg12[%c0_5] : memref<1xf32, #tpu.memory_space<smem>>
    %c0_6 = arith.constant 0 : index
    %c0_7 = arith.constant 0 : index
    %4 = vector.load %arg4[%c0_6, %c0_7] : memref<16x32xf32, #tpu.memory_space<vmem>>, vector<16x32xf32>
    %cst = arith.constant dense<0.000000e+00> : vector<8x32xf32>
    %5 = tpu.matmul %0, %4, %cst {dimension_numbers = #tpu.dot_dimension_numbers<[1], [0], [0], [1], [0, 0, 1, 1], [], []>} : vector<8x16xf32>, vector<16x32xf32>, vector<8x32xf32> -> vector<8x32xf32>
    %c0_8 = arith.constant 0 : index
    %c0_9 = arith.constant 0 : index
    %6 = vector.load %arg5[%c0_8, %c0_9] : memref<1x32xf32, #tpu.memory_space<vmem>>, vector<1x32xf32>
    %7 = vector.broadcast %6 : vector<1x32xf32> to vector<8x32xf32>
    %8 = arith.addf %5, %7 : vector<8x32xf32>
    %c0_10 = arith.constant 0 : index
    %c0_11 = arith.constant 0 : index
    %9 = vector.load %arg6[%c0_10, %c0_11] : memref<32x32xf32, #tpu.memory_space<vmem>>, vector<32x32xf32>
    %cst_12 = arith.constant dense<0.000000e+00> : vector<8x32xf32>
    %10 = tpu.matmul %1, %9, %cst_12 {dimension_numbers = #tpu.dot_dimension_numbers<[1], [0], [0], [1], [0, 0, 1, 1], [], []>} : vector<8x32xf32>, vector<32x32xf32>, vector<8x32xf32> -> vector<8x32xf32>
    %c0_13 = arith.constant 0 : index
    %c0_14 = arith.constant 0 : index
    %11 = vector.load %arg7[%c0_13, %c0_14] : memref<32x1024xf32, #tpu.memory_space<vmem>>, vector<32x1024xf32>
    %cst_15 = arith.constant dense<0.000000e+00> : vector<8x1024xf32>
    %12 = tpu.matmul %1, %11, %cst_15 {dimension_numbers = #tpu.dot_dimension_numbers<[1], [0], [0], [1], [0, 0, 1, 1], [], []>} : vector<8x32xf32>, vector<32x1024xf32>, vector<8x1024xf32> -> vector<8x1024xf32>
    %13 = arith.mulf %2, %12 : vector<8x1024xf32>
    %c0_16 = arith.constant 0 : index
    %c0_17 = arith.constant 0 : index
    %14 = vector.load %arg9[%c0_16, %c0_17] : memref<1024x32xf32, #tpu.memory_space<vmem>>, vector<1024x32xf32>
    %cst_18 = arith.constant dense<0.000000e+00> : vector<8x32xf32>
    %15 = tpu.matmul %13, %14, %cst_18 {dimension_numbers = #tpu.dot_dimension_numbers<[1], [0], [0], [1], [0, 0, 1, 1], [], []>} : vector<8x1024xf32>, vector<1024x32xf32>, vector<8x32xf32> -> vector<8x32xf32>
    %16 = arith.addf %8, %10 : vector<8x32xf32>
    %17 = arith.addf %16, %15 : vector<8x32xf32>
    %18 = math.tanh %17 : vector<8x32xf32>
    %c0_19 = arith.constant 0 : index
    %c0_20 = arith.constant 0 : index
    %19 = vector.load %arg14[%c0_19, %c0_20] : memref<8x32xf32, #tpu.memory_space<vmem>>, vector<8x32xf32>
    tpu.vector_store %arg14[%c0_19, %c0_20], %18 {strides = array<i32>} : memref<8x32xf32, #tpu.memory_space<vmem>>, vector<8x32xf32>,
    %c0_21 = arith.constant 0 : index
    %c0_22 = arith.constant 0 : index
    %20 = vector.load %arg10[%c0_21, %c0_22] : memref<32x128xf32, #tpu.memory_space<vmem>>, vector<32x128xf32>
    %cst_23 = arith.constant dense<0.000000e+00> : vector<8x128xf32>
    %21 = tpu.matmul %18, %20, %cst_23 {dimension_numbers = #tpu.dot_dimension_numbers<[1], [0], [0], [1], [0, 0, 1, 1], [], []>} : vector<8x32xf32>, vector<32x128xf32>, vector<8x128xf32> -> vector<8x128xf32>
    %c0_24 = arith.constant 0 : index
    %c0_25 = arith.constant 0 : index
    %22 = vector.load %arg11[%c0_24, %c0_25] : memref<1x128xf32, #tpu.memory_space<vmem>>, vector<1x128xf32>
    %23 = vector.broadcast %22 : vector<1x128xf32> to vector<8x128xf32>
    %24 = arith.addf %21, %23 : vector<8x128xf32>
    %c0_26 = arith.constant 0 : index
    %c0_27 = arith.constant 0 : index
    %25 = vector.load %arg13[%c0_26, %c0_27] : memref<8x128xf32, #tpu.memory_space<vmem>>, vector<8x128xf32>
    tpu.vector_store %arg13[%c0_26, %c0_27], %24 {strides = array<i32>} : memref<8x128xf32, #tpu.memory_space<vmem>>, vector<8x128xf32>,
    %26 = vector.broadcast %3 : f32 to vector<8x32xf32>
    %27 = arith.mulf %26, %18 : vector<8x32xf32>
    %c0_28 = arith.constant 0 : index
    %c0_29 = arith.constant 0 : index
    %28 = vector.load %arg8[%c0_28, %c0_29] : memref<32x1024xf32, #tpu.memory_space<vmem>>, vector<32x1024xf32>
    %cst_30 = arith.constant dense<0.000000e+00> : vector<8x1024xf32>
    %29 = tpu.matmul %27, %28, %cst_30 {dimension_numbers = #tpu.dot_dimension_numbers<[1], [0], [0], [1], [0, 0, 1, 1], [], []>} : vector<8x32xf32>, vector<32x1024xf32>, vector<8x1024xf32> -> vector<8x1024xf32>
    %30 = arith.mulf %29, %12 : vector<8x1024xf32>
    %31 = arith.addf %2, %30 : vector<8x1024xf32>
    %cst_31 = arith.constant -1.000000e+00 : f32
    %cst_32 = arith.constant 1.000000e+00 : f32
    %32 = vector.broadcast %cst_31 : f32 to vector<8x1024xf32>
    %33 = arith.maximumf %32, %31 : vector<8x1024xf32>
    %34 = vector.broadcast %cst_32 : f32 to vector<8x1024xf32>
    %35 = arith.minimumf %34, %33 : vector<8x1024xf32>
    %c0_33 = arith.constant 0 : index
    %c0_34 = arith.constant 0 : index
    %36 = vector.load %arg15[%c0_33, %c0_34] : memref<8x1024xf32, #tpu.memory_space<vmem>>, vector<8x1024xf32>
    tpu.vector_store %arg15[%c0_33, %c0_34], %35 {strides = array<i32>} : memref<8x1024xf32, #tpu.memory_space<vmem>>, vector<8x1024xf32>,
    return
  }
  func.func @transform_0(%arg0: i32) -> (i32, i32) {
    %c0_i32 = arith.constant 0 : i32
    %c0_i32_0 = arith.constant 0 : i32
    return %arg0, %c0_i32 : i32, i32
  }
  func.func @transform_1(%arg0: i32) -> (i32, i32) {
    %c0_i32 = arith.constant 0 : i32
    %c0_i32_0 = arith.constant 0 : i32
    return %arg0, %c0_i32 : i32, i32
  }
  func.func @transform_2(%arg0: i32) -> (i32, i32) {
    %c0_i32 = arith.constant 0 : i32
    %c0_i32_0 = arith.constant 0 : i32
    return %arg0, %c0_i32 : i32, i32
  }
  func.func @transform_3(%arg0: i32) -> (i32, i32) {
    %c0_i32 = arith.constant 0 : i32
    %c0_i32_0 = arith.constant 0 : i32
    %c0_i32_1 = arith.constant 0 : i32
    return %c0_i32, %c0_i32_0 : i32, i32
  }
  func.func @transform_4(%arg0: i32) -> (i32, i32) {
    %c0_i32 = arith.constant 0 : i32
    %c0_i32_0 = arith.constant 0 : i32
    %c0_i32_1 = arith.constant 0 : i32
    return %c0_i32, %c0_i32_0 : i32, i32
  }
  func.func @transform_5(%arg0: i32) -> (i32, i32) {
    %c0_i32 = arith.constant 0 : i32
    %c0_i32_0 = arith.constant 0 : i32
    %c0_i32_1 = arith.constant 0 : i32
    return %c0_i32, %c0_i32_0 : i32, i32
  }
  func.func @transform_6(%arg0: i32) -> (i32, i32) {
    %c0_i32 = arith.constant 0 : i32
    %c0_i32_0 = arith.constant 0 : i32
    %c0_i32_1 = arith.constant 0 : i32
    return %c0_i32, %c0_i32_0 : i32, i32
  }
  func.func @transform_7(%arg0: i32) -> (i32, i32) {
    %c0_i32 = arith.constant 0 : i32
    %c0_i32_0 = arith.constant 0 : i32
    %c0_i32_1 = arith.constant 0 : i32
    return %c0_i32, %c0_i32_0 : i32, i32
  }
  func.func @transform_8(%arg0: i32) -> (i32, i32) {
    %c0_i32 = arith.constant 0 : i32
    %c0_i32_0 = arith.constant 0 : i32
    %c0_i32_1 = arith.constant 0 : i32
    return %c0_i32, %c0_i32_0 : i32, i32
  }
  func.func @transform_9(%arg0: i32) -> (i32, i32) {
    %c0_i32 = arith.constant 0 : i32
    %c0_i32_0 = arith.constant 0 : i32
    %c0_i32_1 = arith.constant 0 : i32
    return %c0_i32, %c0_i32_0 : i32, i32
  }
  func.func @transform_10(%arg0: i32) -> (i32, i32) {
    %c0_i32 = arith.constant 0 : i32
    %c0_i32_0 = arith.constant 0 : i32
    %c0_i32_1 = arith.constant 0 : i32
    return %c0_i32, %c0_i32_0 : i32, i32
  }
  func.func @transform_11(%arg0: i32) -> i32 {
    %c0_i32 = arith.constant 0 : i32
    %c0_i32_0 = arith.constant 0 : i32
    return %c0_i32 : i32
  }
  func.func @transform_12(%arg0: i32) -> (i32, i32) {
    %c0_i32 = arith.constant 0 : i32
    %c0_i32_0 = arith.constant 0 : i32
    return %arg0, %c0_i32 : i32, i32
  }
  func.func @transform_13(%arg0: i32) -> (i32, i32) {
    %c0_i32 = arith.constant 0 : i32
    %c0_i32_0 = arith.constant 0 : i32
    return %arg0, %c0_i32 : i32, i32
  }
  func.func @transform_14(%arg0: i32) -> (i32, i32) {
    %c0_i32 = arith.constant 0 : i32
    %c0_i32_0 = arith.constant 0 : i32
    return %arg0, %c0_i32 : i32, i32
  }
}

</mosaic_0001>

<llo_original>
// kernel: mul.5
$region0: #{mul.5}
  %s0 = inlined_call_operand.hbm [shape: f32[32,32], index: 0, kind: input, shape index: {}]
  %s1 = inlined_call_operand.vmem [shape: f32[1024], index: 1, kind: output, shape index: {}]
  $region1: #{mul.5} parent=0
    #allocation0 [shape = 'u8[16384]{0}', space=vmem, size = 0x4000, scoped, tag = 'operand span for operand 0']
    #allocation1 [shape = 's32[1]{0}', space=sflag, size = 0x4, scoped, tag = 'scoped memory for mul.5']
    %2 = vsyncpa [#allocation1], 0
    %4 = vsyncadd [#allocation1], 0
    %s6 = sshll.u32 %s0, 4
    %s7 = int_to_ptr.hbm [resolvable:$true] %s6
    %s8 = sshll.u32 [#allocation0], 4
    %s9 = int_to_ptr.vmem [resolvable:$true] %s8
    %11 = dma.hbm_to_vmem [thread:$0]  %s7, 512, %s9, [#allocation1]
    %13 = dma.done [#allocation1], 512
    %v14 = vld [vmem:[#allocation0] ss:$4 sm:$0xff]
    %vm15 = vcmask 261120
    %16 = vst.msk [vmem:[%s1] sm:$0xff] %vm15, %v14
    %s17 = scalar_lea.vmem [#allocation0], 3
    %v18 = vld [vmem:[%s17] ss:$4 sm:$0xff]
    %19 = vrot.lane.b32.xlu0 %v18, 96
    %v20 = vpop.permute.xlu0 %19
    %vm21 = vcmask 1048320
    %22 = vst.msk [vmem:[%s1] sm:$0xff] %vm21, %v20
    %s23 = scalar_lea.vmem [#allocation0], 2
    %v24 = vld [vmem:[%s23] ss:$4 sm:$0xff]
    %25 = vrot.lane.b32.xlu0 %v24, 64
    %v26 = vpop.permute.xlu0 %25
    %vm27 = vcmask 785920
    %28 = vst.msk [vmem:[%s1] sm:$0xff] %vm27, %v26
    %s29 = scalar_lea.vmem [#allocation0], 1
    %v30 = vld [vmem:[%s29] ss:$4 sm:$0xff]
    %31 = vrot.lane.b32.xlu0 %v30, 32
    %v32 = vpop.permute.xlu0 %31
    %vm33 = vcmask 523520
    %34 = vst.msk [vmem:[%s1] sm:$0xff] %vm33, %v32
    %35 = vsyncpa [#allocation1], 1

// kernel: plastic_rnn_step.1
$region0: #{plastic_rnn_step.1}
  #allocation0 [shape = 'u32[]', space=smem, size = 0x4, offset = 0x4, fixed_abs, tag = 'smem constant byte address 0x4 - core index']
  #allocation1 [shape = 'u32[72,128]{1,0:T(1,128)}', space=vmem, size = 0x9000, scoped, tag = 'internal scratch']
  #allocation2 [shape = 'f32[1]{0:T(128)S(6)}', space=smem, size = 0x200, scoped, tag = 'scoped memory for plastic_rnn_step.1']
  %s0 = inlined_call_operand.vmem [shape: f32[16,16], index: 0, kind: input, shape index: {}]
  %s1 = inlined_call_operand.vmem [shape: f32[16,32], index: 1, kind: input, shape index: {}]
  %s2 = inlined_call_operand.vmem [shape: f32[16,1024], index: 2, kind: input, shape index: {}, may-alias: {2,14}]
  %s3 = inlined_call_operand.vmem [shape: f32[16,32], index: 3, kind: input, shape index: {}]
  %s4 = inlined_call_operand.vmem [shape: f32[1,32], index: 4, kind: input, shape index: {}]
  %s5 = inlined_call_operand.vmem [shape: f32[32,32], index: 5, kind: input, shape index: {}]
  %s6 = inlined_call_operand.vmem [shape: f32[32,1024], index: 6, kind: input, shape index: {}]
  %s7 = inlined_call_operand.vmem [shape: f32[32,1024], index: 7, kind: input, shape index: {}]
  %s8 = inlined_call_operand.vmem [shape: f32[1024,32], index: 8, kind: input, shape index: {}]
  %s9 = inlined_call_operand.vmem [shape: f32[32,128], index: 9, kind: input, shape index: {}]
  %s10 = inlined_call_operand.vmem [shape: f32[1,128], index: 10, kind: input, shape index: {}]
  %s11 = inlined_call_operand.<no memory space> [shape: f32[1], index: 11, kind: input, shape index: {}]
  %s12 = inlined_call_operand.vmem [shape: f32[16,128], index: 12, kind: output, shape index: {0}]
  %s13 = inlined_call_operand.hbm [shape: f32[16,32], index: 13, kind: output, shape index: {1}]
  %s14 = inlined_call_operand.vmem [shape: f32[16,1024], index: 14, kind: output, shape index: {2}, may-alias: {2,14}]
  %15 = xla_tuple %s12, %s13, %s14
  %s16 = sld [smem:[#allocation0]]
  $region97: #{plastic_rnn_step.1} parent=0
    _
  %s18 = ssub.s32 1, %s16
  %s19 = scalar_select 0, %s18, %s16
  %20 = sst [smem:[#allocation2]] %s11
  $region1: #{plastic_rnn_step.1} parent=0
    #allocation3 [shape = 'u8[8192]{0}', space=vmem, size = 0x2000, scoped, tag = 'output window, operand 1']
    #allocation4 [shape = 's32[2]{0}', space=sflag, size = 0x8, scoped, tag = 'scoped memory for plastic_rnn_step.1']
    %21 = vsyncpa [#allocation4], 0
    %s22 = scalar_lea.sflag [#allocation4], 1
    %23 = vsyncpa %s22, 0
    loop: start=0, step=1, limit=4
    $region2: #{plastic_rnn_step.1} parent=1 // loop_pre_header
      _
    $region3: #{plastic_rnn_step.1} parent=1 // loop_header
      %s25 = sphi 0, %s29
      %p26 = scmp.ge.s32.totalorder %s25, 4
      %s35 = sphi 0, %s37
      %s38 = sphi 0, %s35
      %s39 = sphi 0, %s38
      %s55 = sphi 0, %s39
      %s61 = sphi 0, %s63
      %s64 = sphi 0, %s61
      %s65 = sphi 0, %s64
      %s81 = sphi 0, %s65
      %s87 = sphi 0, %s89
      %s90 = sphi 0, %s87
      %s91 = sphi 0, %s90
      %s107 = sphi 0, %s91
      %s111 = sphi 0, %s111
      %s113 = sphi 0, %s111
      %s114 = sphi 0, %s113
      %s128 = sphi 0, %s114
      %s132 = sphi 0, %s132
      %s134 = sphi 0, %s132
      %s135 = sphi 0, %s134
      %s149 = sphi 0, %s135
      %s153 = sphi 0, %s153
      %s155 = sphi 0, %s153
      %s156 = sphi 0, %s155
      %s170 = sphi 0, %s156
      %s174 = sphi 0, %s174
      %s176 = sphi 0, %s174
      %s177 = sphi 0, %s176
      %s191 = sphi 0, %s177
      %s195 = sphi 0, %s195
      %s197 = sphi 0, %s195
      %s198 = sphi 0, %s197
      %s212 = sphi 0, %s198
      %s216 = sphi 0, %s216
      %s218 = sphi 0, %s216
      %s219 = sphi 0, %s218
      %s233 = sphi 0, %s219
      %s237 = sphi 0, %s237
      %s239 = sphi 0, %s237
      %s240 = sphi 0, %s239
      %s254 = sphi 0, %s240
      %s258 = sphi 0, %s258
      %s260 = sphi 0, %s258
      %s261 = sphi 0, %s260
      %s275 = sphi 0, %s261
      %s279 = sphi 0, %s279
      %s281 = sphi 0, %s279
      %s282 = sphi 0, %s281
      %s296 = sphi 0, %s282
      %s302 = sphi 0, %s304
      %s305 = sphi 0, %s302
      %s306 = sphi 0, %s305
      %s322 = sphi 0, %s306
      %s328 = sphi 0, %s330
      %s331 = sphi 0, %s328
      %s332 = sphi 0, %s331
      %s348 = sphi 0, %s332
      %s354 = sphi 0, %s356
      %s357 = sphi 0, %s354
      %s358 = sphi 0, %s357
      %s374 = sphi 0, %s358
    $region4: #{plastic_rnn_step.1} parent=1 // loop_header_branch
      %28 = sbr.rel (%p26) target = $region8
    $region5: #{plastic_rnn_step.1} parent=1 // loop_body
      %s30 = ssub.s32 %s25, 1
      %s31 = ssub.s32 %s25, 2
      %s32 = sadd.s32 %s25, 1
      %s33 = ssub.s32 %s25, %s32
      %p34 = scmp.eq.s32.totalorder %s33, 0
      %s36 = sadd.s32 %s35, 1
      %s37 = scalar_select %p34, %s35, %s36
      %p40 = pneg %p34
      %p41 = scmp.eq.s32.totalorder %s25, 1
      %p42 = por %p40, %p41
      %p43 = scmp.ne.s32.totalorder %s35, %s38
      %p44 = scmp.eq.s32.totalorder %s25, 0
      %p45 = por %p43, %p44
      %p46 = scmp.ne.s32.totalorder %s35, %s38
      %p47 = scmp.eq.s32.totalorder %s30, 1
      %p48 = por %p46, %p47
      %p49 = scmp.ne.s32.totalorder %s38, %s39
      %p50 = scmp.eq.s32.totalorder %s30, 0
      %p51 = por %p49, %p50
      %p52 = scmp.ne.s32.totalorder %s38, %s39
      %p53 = scmp.eq.s32.totalorder %s31, 1
      %p54 = por %p52, %p53
      %p56 = scmp.ne.s32.totalorder %s39, %s55
      %p57 = scmp.eq.s32.totalorder %s31, 0
      %p58 = por %p56, %p57
      %s59 = ssub.s32 %s25, %s32
      %p60 = scmp.eq.s32.totalorder %s59, 0
      %s62 = sadd.s32 %s61, 1
      %s63 = scalar_select %p60, %s61, %s62
      %p66 = pneg %p60
      %p67 = scmp.eq.s32.totalorder %s25, 1
      %p68 = por %p66, %p67
      %p69 = scmp.ne.s32.totalorder %s61, %s64
      %p70 = scmp.eq.s32.totalorder %s25, 0
      %p71 = por %p69, %p70
      %p72 = scmp.ne.s32.totalorder %s61, %s64
      %p73 = scmp.eq.s32.totalorder %s30, 1
      %p74 = por %p72, %p73
      %p75 = scmp.ne.s32.totalorder %s64, %s65
      %p76 = scmp.eq.s32.totalorder %s30, 0
      %p77 = por %p75, %p76
      %p78 = scmp.ne.s32.totalorder %s64, %s65
      %p79 = scmp.eq.s32.totalorder %s31, 1
      %p80 = por %p78, %p79
      %p82 = scmp.ne.s32.totalorder %s65, %s81
      %p83 = scmp.eq.s32.totalorder %s31, 0
      %p84 = por %p82, %p83
      %s85 = ssub.s32 %s25, %s32
      %p86 = scmp.eq.s32.totalorder %s85, 0
      %s88 = sadd.s32 %s87, 1
      %s89 = scalar_select %p86, %s87, %s88
      %p92 = pneg %p86
      %p93 = scmp.eq.s32.totalorder %s25, 1
      %p94 = por %p92, %p93
      %p95 = scmp.ne.s32.totalorder %s87, %s90
      %p96 = scmp.eq.s32.totalorder %s25, 0
      %p97 = por %p95, %p96
      %p98 = scmp.ne.s32.totalorder %s87, %s90
      %p99 = scmp.eq.s32.totalorder %s30, 1
      %p100 = por %p98, %p99
      %p101 = scmp.ne.s32.totalorder %s90, %s91
      %p102 = scmp.eq.s32.totalorder %s30, 0
      %p103 = por %p101, %p102
      %p104 = scmp.ne.s32.totalorder %s90, %s91
      %p105 = scmp.eq.s32.totalorder %s31, 1
      %p106 = por %p104, %p105
      %p108 = scmp.ne.s32.totalorder %s91, %s107
      %p109 = scmp.eq.s32.totalorder %s31, 0
      %p110 = por %p108, %p109
      %s112 = sadd.s32 %s111, 1
      %p115 = scmp.eq.s32.totalorder %s25, 1
      %p116 = scmp.ne.s32.totalorder %s111, %s113
      %p117 = scmp.eq.s32.totalorder %s25, 0
      %p118 = por %p116, %p117
      %p119 = scmp.ne.s32.totalorder %s111, %s113
      %p120 = scmp.eq.s32.totalorder %s30, 1
      %p121 = por %p119, %p120
      %p122 = scmp.ne.s32.totalorder %s113, %s114
      %p123 = scmp.eq.s32.totalorder %s30, 0
      %p124 = por %p122, %p123
      %p125 = scmp.ne.s32.totalorder %s113, %s114
      %p126 = scmp.eq.s32.totalorder %s31, 1
      %p127 = por %p125, %p126
      %p129 = scmp.ne.s32.totalorder %s114, %s128
      %p130 = scmp.eq.s32.totalorder %s31, 0
      %p131 = por %p129, %p130
      %s133 = sadd.s32 %s132, 1
      %p136 = scmp.eq.s32.totalorder %s25, 1
      %p137 = scmp.ne.s32.totalorder %s132, %s134
      %p138 = scmp.eq.s32.totalorder %s25, 0
      %p139 = por %p137, %p138
      %p140 = scmp.ne.s32.totalorder %s132, %s134
      %p141 = scmp.eq.s32.totalorder %s30, 1
      %p142 = por %p140, %p141
      %p143 = scmp.ne.s32.totalorder %s134, %s135
      %p144 = scmp.eq.s32.totalorder %s30, 0
      %p145 = por %p143, %p144
      %p146 = scmp.ne.s32.totalorder %s134, %s135
      %p147 = scmp.eq.s32.totalorder %s31, 1
      %p148 = por %p146, %p147
      %p150 = scmp.ne.s32.totalorder %s135, %s149
      %p151 = scmp.eq.s32.totalorder %s31, 0
      %p152 = por %p150, %p151
      %s154 = sadd.s32 %s153, 1
      %p157 = scmp.eq.s32.totalorder %s25, 1
      %p158 = scmp.ne.s32.totalorder %s153, %s155
      %p159 = scmp.eq.s32.totalorder %s25, 0
      %p160 = por %p158, %p159
      %p161 = scmp.ne.s32.totalorder %s153, %s155
      %p162 = scmp.eq.s32.totalorder %s30, 1
      %p163 = por %p161, %p162
      %p164 = scmp.ne.s32.totalorder %s155, %s156
      %p165 = scmp.eq.s32.totalorder %s30, 0
      %p166 = por %p164, %p165
      %p167 = scmp.ne.s32.totalorder %s155, %s156
      %p168 = scmp.eq.s32.totalorder %s31, 1
      %p169 = por %p167, %p168
      %p171 = scmp.ne.s32.totalorder %s156, %s170
      %p172 = scmp.eq.s32.totalorder %s31, 0
      %p173 = por %p171, %p172
      %s175 = sadd.s32 %s174, 1
      %p178 = scmp.eq.s32.totalorder %s25, 1
      %p179 = scmp.ne.s32.totalorder %s174, %s176
      %p180 = scmp.eq.s32.totalorder %s25, 0
      %p181 = por %p179, %p180
      %p182 = scmp.ne.s32.totalorder %s174, %s176
      %p183 = scmp.eq.s32.totalorder %s30, 1
      %p184 = por %p182, %p183
      %p185 = scmp.ne.s32.totalorder %s176, %s177
      %p186 = scmp.eq.s32.totalorder %s30, 0
      %p187 = por %p185, %p186
      %p188 = scmp.ne.s32.totalorder %s176, %s177
      %p189 = scmp.eq.s32.totalorder %s31, 1
      %p190 = por %p188, %p189
      %p192 = scmp.ne.s32.totalorder %s177, %s191
      %p193 = scmp.eq.s32.totalorder %s31, 0
      %p194 = por %p192, %p193
      %s196 = sadd.s32 %s195, 1
      %p199 = scmp.eq.s32.totalorder %s25, 1
      %p200 = scmp.ne.s32.totalorder %s195, %s197
      %p201 = scmp.eq.s32.totalorder %s25, 0
      %p202 = por %p200, %p201
      %p203 = scmp.ne.s32.totalorder %s195, %s197
      %p204 = scmp.eq.s32.totalorder %s30, 1
      %p205 = por %p203, %p204
      %p206 = scmp.ne.s32.totalorder %s197, %s198
      %p207 = scmp.eq.s32.totalorder %s30, 0
      %p208 = por %p206, %p207
      %p209 = scmp.ne.s32.totalorder %s197, %s198
      %p210 = scmp.eq.s32.totalorder %s31, 1
      %p211 = por %p209, %p210
      %p213 = scmp.ne.s32.totalorder %s198, %s212
      %p214 = scmp.eq.s32.totalorder %s31, 0
      %p215 = por %p213, %p214
      %s217 = sadd.s32 %s216, 1
      %p220 = scmp.eq.s32.totalorder %s25, 1
      %p221 = scmp.ne.s32.totalorder %s216, %s218
      %p222 = scmp.eq.s32.totalorder %s25, 0
      %p223 = por %p221, %p222
      %p224 = scmp.ne.s32.totalorder %s216, %s218
      %p225 = scmp.eq.s32.totalorder %s30, 1
      %p226 = por %p224, %p225
      %p227 = scmp.ne.s32.totalorder %s218, %s219
      %p228 = scmp.eq.s32.totalorder %s30, 0
      %p229 = por %p227, %p228
      %p230 = scmp.ne.s32.totalorder %s218, %s219
      %p231 = scmp.eq.s32.totalorder %s31, 1
      %p232 = por %p230, %p231
      %p234 = scmp.ne.s32.totalorder %s219, %s233
      %p235 = scmp.eq.s32.totalorder %s31, 0
      %p236 = por %p234, %p235
      %s238 = sadd.s32 %s237, 1
      %p241 = scmp.eq.s32.totalorder %s25, 1
      %p242 = scmp.ne.s32.totalorder %s237, %s239
      %p243 = scmp.eq.s32.totalorder %s25, 0
      %p244 = por %p242, %p243
      %p245 = scmp.ne.s32.totalorder %s237, %s239
      %p246 = scmp.eq.s32.totalorder %s30, 1
      %p247 = por %p245, %p246
      %p248 = scmp.ne.s32.totalorder %s239, %s240
      %p249 = scmp.eq.s32.totalorder %s30, 0
      %p250 = por %p248, %p249
      %p251 = scmp.ne.s32.totalorder %s239, %s240
      %p252 = scmp.eq.s32.totalorder %s31, 1
      %p253 = por %p251, %p252
      %p255 = scmp.ne.s32.totalorder %s240, %s254
      %p256 = scmp.eq.s32.totalorder %s31, 0
      %p257 = por %p255, %p256
      %s259 = sadd.s32 %s258, 1
      %p262 = scmp.eq.s32.totalorder %s25, 1
      %p263 = scmp.ne.s32.totalorder %s258, %s260
      %p264 = scmp.eq.s32.totalorder %s25, 0
      %p265 = por %p263, %p264
      %p266 = scmp.ne.s32.totalorder %s258, %s260
      %p267 = scmp.eq.s32.totalorder %s30, 1
      %p268 = por %p266, %p267
      %p269 = scmp.ne.s32.totalorder %s260, %s261
      %p270 = scmp.eq.s32.totalorder %s30, 0
      %p271 = por %p269, %p270
      %p272 = scmp.ne.s32.totalorder %s260, %s261
      %p273 = scmp.eq.s32.totalorder %s31, 1
      %p274 = por %p272, %p273
      %p276 = scmp.ne.s32.totalorder %s261, %s275
      %p277 = scmp.eq.s32.totalorder %s31, 0
      %p278 = por %p276, %p277
      %s280 = sadd.s32 %s279, 1
      %p283 = scmp.eq.s32.totalorder %s25, 1
      %p284 = scmp.ne.s32.totalorder %s279, %s281
      %p285 = scmp.eq.s32.totalorder %s25, 0
      %p286 = por %p284, %p285
      %p287 = scmp.ne.s32.totalorder %s279, %s281
      %p288 = scmp.eq.s32.totalorder %s30, 1
      %p289 = por %p287, %p288
      %p290 = scmp.ne.s32.totalorder %s281, %s282
      %p291 = scmp.eq.s32.totalorder %s30, 0
      %p292 = por %p290, %p291
      %p293 = scmp.ne.s32.totalorder %s281, %s282
      %p294 = scmp.eq.s32.totalorder %s31, 1
      %p295 = por %p293, %p294
      %p297 = scmp.ne.s32.totalorder %s282, %s296
      %p298 = scmp.eq.s32.totalorder %s31, 0
      %p299 = por %p297, %p298
      %s300 = ssub.s32 %s25, %s32
      %p301 = scmp.eq.s32.totalorder %s300, 0
      %s303 = sadd.s32 %s302, 1
      %s304 = scalar_select %p301, %s302, %s303
      %p307 = pneg %p301
      %p308 = scmp.eq.s32.totalorder %s25, 1
      %p309 = por %p307, %p308
      %p310 = scmp.ne.s32.totalorder %s302, %s305
      %p311 = scmp.eq.s32.totalorder %s25, 0
      %p312 = por %p310, %p311
      %p313 = scmp.ne.s32.totalorder %s302, %s305
      %p314 = scmp.eq.s32.totalorder %s30, 1
      %p315 = por %p313, %p314
      %p316 = scmp.ne.s32.totalorder %s305, %s306
      %p317 = scmp.eq.s32.totalorder %s30, 0
      %p318 = por %p316, %p317
      %p319 = scmp.ne.s32.totalorder %s305, %s306
      %p320 = scmp.eq.s32.totalorder %s31, 1
      %p321 = por %p319, %p320
      %p323 = scmp.ne.s32.totalorder %s306, %s322
      %p324 = scmp.eq.s32.totalorder %s31, 0
      %p325 = por %p323, %p324
      %s326 = ssub.s32 %s25, %s32
      %p327 = scmp.eq.s32.totalorder %s326, 0
      %s329 = sadd.s32 %s328, 1
      %s330 = scalar_select %p327, %s328, %s329
      %p333 = pneg %p327
      %p334 = scmp.eq.s32.totalorder %s25, 1
      %p335 = por %p333, %p334
      %p336 = scmp.ne.s32.totalorder %s328, %s331
      %p337 = scmp.eq.s32.totalorder %s25, 0
      %p338 = por %p336, %p337
      %p339 = scmp.ne.s32.totalorder %s328, %s331
      %p340 = scmp.eq.s32.totalorder %s30, 1
      %p341 = por %p339, %p340
      %p342 = scmp.ne.s32.totalorder %s331, %s332
      %p343 = scmp.eq.s32.totalorder %s30, 0
      %p344 = por %p342, %p343
      %p345 = scmp.ne.s32.totalorder %s331, %s332
      %p346 = scmp.eq.s32.totalorder %s31, 1
      %p347 = por %p345, %p346
      %p349 = scmp.ne.s32.totalorder %s332, %s348
      %p350 = scmp.eq.s32.totalorder %s31, 0
      %p351 = por %p349, %p350
      %s352 = ssub.s32 %s25, %s32
      %p353 = scmp.eq.s32.totalorder %s352, 0
      %s355 = sadd.s32 %s354, 1
      %s356 = scalar_select %p353, %s354, %s355
      %p359 = pneg %p353
      %p360 = scmp.eq.s32.totalorder %s25, 1
      %p361 = por %p359, %p360
      %p362 = scmp.ne.s32.totalorder %s354, %s357
      %p363 = scmp.eq.s32.totalorder %s25, 0
      %p364 = por %p362, %p363
      %p365 = scmp.ne.s32.totalorder %s354, %s357
      %p366 = scmp.eq.s32.totalorder %s30, 1
      %p367 = por %p365, %p366
      %p368 = scmp.ne.s32.totalorder %s357, %s358
      %p369 = scmp.eq.s32.totalorder %s30, 0
      %p370 = por %p368, %p369
      %p371 = scmp.ne.s32.totalorder %s357, %s358
      %p372 = scmp.eq.s32.totalorder %s31, 1
      %p373 = por %p371, %p372
      %p375 = scmp.ne.s32.totalorder %s358, %s374
      %p376 = scmp.eq.s32.totalorder %s31, 0
      %p377 = por %p375, %p376
      %p378 = scmp.le.s32.totalorder 1, %s25
      %p379 = scmp.lt.s32.totalorder %s25, 3
      %p380 = pnand %p378, %p379
      %p381 = pneg %p380
      // Predicated region
      $region9: #{plastic_rnn_step.1} parent=5 // pred_check
        _
      $region10: #{plastic_rnn_step.1} parent=5 // pred_check_branch
        %383 = sbr.rel (%p380) target = $region12
      $region11: #{plastic_rnn_step.1} parent=5 // pred_region
        %s384 = ssub.s32 %s25, 1
        // Predicated region
        $region13: #{plastic_rnn_step.1} parent=11 // pred_check
          %p385 = pneg %p124
        $region14: #{plastic_rnn_step.1} parent=11 // pred_check_branch
          %387 = sbr.rel (%p385) target = $region16
        $region15: #{plastic_rnn_step.1} parent=11 // pred_region
          _
        $region16: #{plastic_rnn_step.1} parent=11 // pred_fallthru
          _
        // Predicated region
        $region17: #{plastic_rnn_step.1} parent=11 // pred_check
          %p388 = pneg %p145
        $region18: #{plastic_rnn_step.1} parent=11 // pred_check_branch
          %390 = sbr.rel (%p388) target = $region20
        $region19: #{plastic_rnn_step.1} parent=11 // pred_region
          _
        $region20: #{plastic_rnn_step.1} parent=11 // pred_fallthru
          _
        // Predicated region
        $region21: #{plastic_rnn_step.1} parent=11 // pred_check
          %p391 = pneg %p166
        $region22: #{plastic_rnn_step.1} parent=11 // pred_check_branch
          %393 = sbr.rel (%p391) target = $region24
        $region23: #{plastic_rnn_step.1} parent=11 // pred_region
          _
        $region24: #{plastic_rnn_step.1} parent=11 // pred_fallthru
          _
        // Predicated region
        $region25: #{plastic_rnn_step.1} parent=11 // pred_check
          %p394 = pneg %p187
        $region26: #{plastic_rnn_step.1} parent=11 // pred_check_branch
          %396 = sbr.rel (%p394) target = $region28
        $region27: #{plastic_rnn_step.1} parent=11 // pred_region
          _
        $region28: #{plastic_rnn_step.1} parent=11 // pred_fallthru
          _
        // Predicated region
        $region29: #{plastic_rnn_step.1} parent=11 // pred_check
          %p397 = pneg %p208
        $region30: #{plastic_rnn_step.1} parent=11 // pred_check_branch
          %399 = sbr.rel (%p397) target = $region32
        $region31: #{plastic_rnn_step.1} parent=11 // pred_region
          _
        $region32: #{plastic_rnn_step.1} parent=11 // pred_fallthru
          _
        // Predicated region
        $region33: #{plastic_rnn_step.1} parent=11 // pred_check
          %p400 = pneg %p229
        $region34: #{plastic_rnn_step.1} parent=11 // pred_check_branch
          %402 = sbr.rel (%p400) target = $region36
        $region35: #{plastic_rnn_step.1} parent=11 // pred_region
          _
        $region36: #{plastic_rnn_step.1} parent=11 // pred_fallthru
          _
        // Predicated region
        $region37: #{plastic_rnn_step.1} parent=11 // pred_check
          %p403 = pneg %p250
        $region38: #{plastic_rnn_step.1} parent=11 // pred_check_branch
          %405 = sbr.rel (%p403) target = $region40
        $region39: #{plastic_rnn_step.1} parent=11 // pred_region
          _
        $region40: #{plastic_rnn_step.1} parent=11 // pred_fallthru
          _
        // Predicated region
        $region41: #{plastic_rnn_step.1} parent=11 // pred_check
          %p406 = pneg %p271
        $region42: #{plastic_rnn_step.1} parent=11 // pred_check_branch
          %408 = sbr.rel (%p406) target = $region44
        $region43: #{plastic_rnn_step.1} parent=11 // pred_region
          _
        $region44: #{plastic_rnn_step.1} parent=11 // pred_fallthru
          _
        // Predicated region
        $region45: #{plastic_rnn_step.1} parent=11 // pred_check
          %p409 = pneg %p292
        $region46: #{plastic_rnn_step.1} parent=11 // pred_check_branch
          %411 = sbr.rel (%p409) target = $region48
        $region47: #{plastic_rnn_step.1} parent=11 // pred_region
          _
        $region48: #{plastic_rnn_step.1} parent=11 // pred_fallthru
          _
      $region12: #{plastic_rnn_step.1} parent=5 // pred_fallthru
        _
      %p412 = scmp.lt.s32.totalorder %s25, 2
      // Predicated region
      $region49: #{plastic_rnn_step.1} parent=5 // pred_check
        %p413 = pneg %p412
      $region50: #{plastic_rnn_step.1} parent=5 // pred_check_branch
        %415 = sbr.rel (%p413) target = $region52
      $region51: #{plastic_rnn_step.1} parent=5 // pred_region
        // Predicated region
        $region53: #{plastic_rnn_step.1} parent=51 // pred_check
          %p416 = pneg %p45
        $region54: #{plastic_rnn_step.1} parent=51 // pred_check_branch
          %418 = sbr.rel (%p416) target = $region56
        $region55: #{plastic_rnn_step.1} parent=51 // pred_region
          %p419 = scmp.lt.s32.totalorder %s25, 1
          %s420 = scalar_select %p419, %s25, 1
          %s421 = smul.addr %s420, 8
          %s422 = scalar_lea.vmem %s0, %s421
        $region56: #{plastic_rnn_step.1} parent=51 // pred_fallthru
          _
        // Predicated region
        $region57: #{plastic_rnn_step.1} parent=51 // pred_check
          %p423 = pneg %p71
        $region58: #{plastic_rnn_step.1} parent=51 // pred_check_branch
          %425 = sbr.rel (%p423) target = $region60
        $region59: #{plastic_rnn_step.1} parent=51 // pred_region
          %p426 = scmp.lt.s32.totalorder %s25, 1
          %s427 = scalar_select %p426, %s25, 1
          %s428 = smul.addr %s427, 8
          %s429 = scalar_lea.vmem %s1, %s428
        $region60: #{plastic_rnn_step.1} parent=51 // pred_fallthru
          _
        // Predicated region
        $region61: #{plastic_rnn_step.1} parent=51 // pred_check
          %p430 = pneg %p97
        $region62: #{plastic_rnn_step.1} parent=51 // pred_check_branch
          %432 = sbr.rel (%p430) target = $region64
        $region63: #{plastic_rnn_step.1} parent=51 // pred_region
          %p433 = scmp.lt.s32.totalorder %s25, 1
          %s434 = scalar_select %p433, %s25, 1
          %s435 = smul.addr %s434, 8
          %s436 = smul.addr %s435, 8
          %s437 = scalar_lea.vmem %s2, %s436
        $region64: #{plastic_rnn_step.1} parent=51 // pred_fallthru
          _
      $region52: #{plastic_rnn_step.1} parent=5 // pred_fallthru
        _
      %p438 = scmp.le.s32.totalorder 1, %s25
      %p439 = scmp.lt.s32.totalorder %s25, 3
      %p440 = pnand %p438, %p439
      %p441 = pneg %p440
      // Predicated region
      $region65: #{plastic_rnn_step.1} parent=5 // pred_check
        _
      $region66: #{plastic_rnn_step.1} parent=5 // pred_check_branch
        %443 = sbr.rel (%p440) target = $region68
      $region67: #{plastic_rnn_step.1} parent=5 // pred_region
        %s444 = ssub.s32 %s25, 1
        %p445 = scmp.lt.s32.totalorder %s30, 1
        %s446 = scalar_select %p445, %s30, 1
        %s447 = smul.addr %s446, 8
        %s448 = scalar_lea.vmem %s0, %s447
        %p449 = pneg %p51
        %p450 = pneg %p48
        %p451 = scmp.lt.s32.totalorder %s30, 1
        %s452 = scalar_select %p451, %s30, 1
        %s453 = smul.addr %s452, 8
        %s454 = scalar_lea.vmem %s1, %s453
        %p455 = pneg %p77
        %p456 = pneg %p74
        %p457 = scmp.lt.s32.totalorder %s30, 1
        %s458 = scalar_select %p457, %s30, 1
        %s459 = smul.addr %s458, 8
        %s460 = smul.addr %s459, 8
        %s461 = scalar_lea.vmem %s2, %s460
        %p462 = pneg %p103
        %p463 = pneg %p100
        %p464 = pneg %p124
        %p465 = pneg %p121
        %p466 = pneg %p145
        %p467 = pneg %p142
        %p468 = pneg %p166
        %p469 = pneg %p163
        %p470 = pneg %p187
        %p471 = pneg %p184
        %p472 = pneg %p208
        %p473 = pneg %p205
        %p474 = pneg %p229
        %p475 = pneg %p226
        %p476 = pneg %p250
        %p477 = pneg %p247
        %p478 = pneg %p271
        %p479 = pneg %p268
        %p480 = pneg %p292
        %p481 = pneg %p289
        %p482 = pneg %p318
        %p483 = pneg %p315
        %p484 = scmp.lt.s32.totalorder %s30, 1
        %s485 = scalar_select %p484, %s30, 1
        %s486 = smul.addr %s485, 8
        %s487 = scalar_lea.vmem %s12, %s486
        %p488 = pneg %p344
        %p489 = pneg %p341
        %s490 = sand.u32 %s331, 1
        %s491 = scalar_lea.sflag [#allocation4], %s490
        %s492 = sand.u32 %s331, 1
        %s493 = smul.addr %s492, 8
        %s494 = scalar_lea.vmem [#allocation3], %s493
        %p495 = pneg %p370
        %p496 = pneg %p367
        %p497 = scmp.lt.s32.totalorder %s30, 1
        %s498 = scalar_select %p497, %s30, 1
        %s499 = smul.addr %s498, 8
        %s500 = smul.addr %s499, 8
        %s501 = scalar_lea.vmem %s14, %s500
        %p502 = scmp.lt.s32.totalorder %s30, 1
        %s503 = scalar_select %p502, %s30, 1
        %s504 = smul.addr %s503, 8
        %s505 = scalar_lea.vmem %s0, %s504
        %p506 = scmp.lt.s32.totalorder %s30, 1
        %s507 = scalar_select %p506, %s30, 1
        %s508 = smul.addr %s507, 8
        %s509 = scalar_lea.vmem %s1, %s508
        %p510 = scmp.lt.s32.totalorder %s30, 1
        %s511 = scalar_select %p510, %s30, 1
        %s512 = smul.addr %s511, 8
        %s513 = smul.addr %s512, 8
        %s514 = scalar_lea.vmem %s2, %s513
        %p515 = scmp.lt.s32.totalorder %s30, 1
        %s516 = scalar_select %p515, %s30, 1
        %s517 = smul.addr %s516, 8
        %s518 = scalar_lea.vmem %s12, %s517
        %p519 = scmp.lt.s32.totalorder %s30, 1
        %s520 = scalar_select %p519, %s30, 1
        %s521 = smul.addr %s520, 8
        %s522 = smul.addr %s521, 8
        %s523 = scalar_lea.vmem %s14, %s522
        %v524 = vld [vmem:[%s505] sm:$0xff]
        %v525 = vld [vmem:[%s509] sm:$0xff]
        %v526 = vld [vmem:[%s514] sm:$0xff]
        %v527 = vld [vmem:[%s514 + $0x8] sm:$0xff]
        %v528 = vld [vmem:[%s514 + $0x10] sm:$0xff]
        %v529 = vld [vmem:[%s514 + $0x18] sm:$0xff]
        %v530 = vld [vmem:[%s514 + $0x20] sm:$0xff]
        %v531 = vld [vmem:[%s514 + $0x28] sm:$0xff]
        %v532 = vld [vmem:[%s514 + $0x30] sm:$0xff]
        %v533 = vld [vmem:[%s514 + $0x38] sm:$0xff]
        %s534 = sld [smem:[#allocation2]]
        %v535 = vld [vmem:[%s3] sm:$0xff]
        %v536 = vld [vmem:[%s3 + $0x8] sm:$0xff]
        %v537 = vld [vmem:[%s4] sm:$0x1]
        %v539 = vperm.slane %v537, 0
        %vm541 = vcmask 130048
        %v543 = vsel %vm541, %v524, 0
        %545 = vmatpush.msra.mxu0 0.0
        %546 = vmatpush.msra.mxu0 0.0
        %547 = vmatpush.msra.mxu0 0.0
        %548 = vmatpush.msra.mxu0 0.0
        %549 = vmatpush.msra.mxu0 0.0
        %550 = vmatpush.msra.mxu0 0.0
        %551 = vmatpush.msra.mxu0 0.0
        %552 = vmatpush.msra.mxu0 0.0
        %553 = vmatpush.msra.mxu0 0.0
        %554 = vmatpush.msra.mxu0 0.0
        %555 = vmatpush.msra.mxu0 0.0
        %556 = vmatpush.msra.mxu0 0.0
        %557 = vmatpush.msra.mxu0 0.0
        %558 = vmatpush.msra.mxu0 0.0
        %559 = vmatpush.msra.mxu0 %v536
        %560 = vmatpush.msra.mxu0 %v535
        %561 = vmatmul.f32.gmra.mxu0 %v543
        %v562 = vpop.f32.mrf.mxu0
        %v563 = vadd.f32 %v539, %v562
        %564 = vdwg.mxu0
        %v565 = vld [vmem:[%s5] sm:$0xff]
        %v566 = vld [vmem:[%s5 + $0x8] sm:$0xff]
        %v567 = vld [vmem:[%s5 + $0x10] sm:$0xff]
        %v568 = vld [vmem:[%s5 + $0x18] sm:$0xff]
        %vm569 = vcmask 261120
        %v571 = vsel %vm569, %v525, 0
        %573 = vmatpush.msra.mxu0 0.0
        %574 = vmatpush.msra.mxu0 0.0
        %575 = vmatpush.msra.mxu0 0.0
        %576 = vmatpush.msra.mxu0 0.0
        %577 = vmatpush.msra.mxu0 0.0
        %578 = vmatpush.msra.mxu0 0.0
        %579 = vmatpush.msra.mxu0 0.0
        %580 = vmatpush.msra.mxu0 0.0
        %581 = vmatpush.msra.mxu0 0.0
        %582 = vmatpush.msra.mxu0 0.0
        %583 = vmatpush.msra.mxu0 0.0
        %584 = vmatpush.msra.mxu0 0.0
        %585 = vmatpush.msra.mxu0 %v568
        %586 = vmatpush.msra.mxu0 %v567
        %587 = vmatpush.msra.mxu0 %v566
        %588 = vmatpush.msra.mxu0 %v565
        %589 = vmatmul.f32.gmra.mxu0 %v571
        %v590 = vpop.f32.mrf.mxu0
        %v591 = vadd.f32 0.0, %v590
        %592 = vdwg.mxu0
        %v593 = vld [vmem:[%s6] sm:$0xff]
        %v594 = vld [vmem:[%s6 + $0x8] sm:$0xff]
        %v595 = vld [vmem:[%s6 + $0x10] sm:$0xff]
        %v596 = vld [vmem:[%s6 + $0x18] sm:$0xff]
        %v597 = vld [vmem:[%s6 + $0x20] sm:$0xff]
        %v598 = vld [vmem:[%s6 + $0x28] sm:$0xff]
        %v599 = vld [vmem:[%s6 + $0x30] sm:$0xff]
        %v600 = vld [vmem:[%s6 + $0x38] sm:$0xff]
        %v601 = vld [vmem:[%s6 + $0x40] sm:$0xff]
        %v602 = vld [vmem:[%s6 + $0x48] sm:$0xff]
        %v603 = vld [vmem:[%s6 + $0x50] sm:$0xff]
        %v604 = vld [vmem:[%s6 + $0x58] sm:$0xff]
        %v605 = vld [vmem:[%s6 + $0x60] sm:$0xff]
        %v606 = vld [vmem:[%s6 + $0x68] sm:$0xff]
        %v607 = vld [vmem:[%s6 + $0x70] sm:$0xff]
        %v608 = vld [vmem:[%s6 + $0x78] sm:$0xff]
        %v609 = vld [vmem:[%s6 + $0x80] sm:$0xff]
        %v610 = vld [vmem:[%s6 + $0x88] sm:$0xff]
        %v611 = vld [vmem:[%s6 + $0x90] sm:$0xff]
        %v612 = vld [vmem:[%s6 + $0x98] sm:$0xff]
        %v613 = vld [vmem:[%s6 + $0xa0] sm:$0xff]
        %v614 = vld [vmem:[%s6 + $0xa8] sm:$0xff]
        %v615 = vld [vmem:[%s6 + $0xb0] sm:$0xff]
        %v616 = vld [vmem:[%s6 + $0xb8] sm:$0xff]
        %v617 = vld [vmem:[%s6 + $0xc0] sm:$0xff]
        %v618 = vld [vmem:[%s6 + $0xc8] sm:$0xff]
        %v619 = vld [vmem:[%s6 + $0xd0] sm:$0xff]
        %v620 = vld [vmem:[%s6 + $0xd8] sm:$0xff]
        %v621 = vld [vmem:[%s6 + $0xe0] sm:$0xff]
        %v622 = vld [vmem:[%s6 + $0xe8] sm:$0xff]
        %v623 = vld [vmem:[%s6 + $0xf0] sm:$0xff]
        %v624 = vld [vmem:[%s6 + $0xf8] sm:$0xff]
        %625 = vmatpush.msra.mxu0 0.0
        %626 = vmatpush.msra.mxu0 0.0
        %627 = vmatpush.msra.mxu0 0.0
        %628 = vmatpush.msra.mxu0 0.0
        %629 = vmatpush.msra.mxu0 0.0
        %630 = vmatpush.msra.mxu0 0.0
        %631 = vmatpush.msra.mxu0 0.0
        %632 = vmatpush.msra.mxu0 0.0
        %633 = vmatpush.msra.mxu0 0.0
        %634 = vmatpush.msra.mxu0 0.0
        %635 = vmatpush.msra.mxu0 0.0
        %636 = vmatpush.msra.mxu0 0.0
        %637 = vmatpush.msra.mxu0 %v617
        %638 = vmatpush.msra.mxu0 %v609
        %639 = vmatpush.msra.mxu0 %v601
        %640 = vmatpush.msra.mxu0 %v593
        %641 = vmatmul.f32.gmra.mxu0 %v571
        %v642 = vpop.f32.mrf.mxu0
        %v643 = vadd.f32 0.0, %v642
        %644 = vdwg.mxu0
        %645 = vmatpush.msra.mxu0 0.0
        %646 = vmatpush.msra.mxu0 0.0
        %647 = vmatpush.msra.mxu0 0.0
        %648 = vmatpush.msra.mxu0 0.0
        %649 = vmatpush.msra.mxu0 0.0
        %650 = vmatpush.msra.mxu0 0.0
        %651 = vmatpush.msra.mxu0 0.0
        %652 = vmatpush.msra.mxu0 0.0
        %653 = vmatpush.msra.mxu0 0.0
        %654 = vmatpush.msra.mxu0 0.0
        %655 = vmatpush.msra.mxu0 0.0
        %656 = vmatpush.msra.mxu0 0.0
        %657 = vmatpush.msra.mxu0 %v618
        %658 = vmatpush.msra.mxu0 %v610
        %659 = vmatpush.msra.mxu0 %v602
        %660 = vmatpush.msra.mxu0 %v594
        %661 = vmatmul.f32.gmra.mxu0 %v571
        %v662 = vpop.f32.mrf.mxu0
        %v663 = vadd.f32 0.0, %v662
        %664 = vdwg.mxu0
        %665 = vmatpush.msra.mxu0 0.0
        %666 = vmatpush.msra.mxu0 0.0
        %667 = vmatpush.msra.mxu0 0.0
        %668 = vmatpush.msra.mxu0 0.0
        %669 = vmatpush.msra.mxu0 0.0
        %670 = vmatpush.msra.mxu0 0.0
        %671 = vmatpush.msra.mxu0 0.0
        %672 = vmatpush.msra.mxu0 0.0
        %673 = vmatpush.msra.mxu0 0.0
        %674 = vmatpush.msra.mxu0 0.0
        %675 = vmatpush.msra.mxu0 0.0
        %676 = vmatpush.msra.mxu0 0.0
        %677 = vmatpush.msra.mxu0 %v619
        %678 = vmatpush.msra.mxu0 %v611
        %679 = vmatpush.msra.mxu0 %v603
        %680 = vmatpush.msra.mxu0 %v595
        %681 = vmatmul.f32.gmra.mxu0 %v571
        %v682 = vpop.f32.mrf.mxu0
        %v683 = vadd.f32 0.0, %v682
        %684 = vdwg.mxu0
        %685 = vmatpush.msra.mxu0 0.0
        %686 = vmatpush.msra.mxu0 0.0
        %687 = vmatpush.msra.mxu0 0.0
        %688 = vmatpush.msra.mxu0 0.0
        %689 = vmatpush.msra.mxu0 0.0
        %690 = vmatpush.msra.mxu0 0.0
        %691 = vmatpush.msra.mxu0 0.0
        %692 = vmatpush.msra.mxu0 0.0
        %693 = vmatpush.msra.mxu0 0.0
        %694 = vmatpush.msra.mxu0 0.0
        %695 = vmatpush.msra.mxu0 0.0
        %696 = vmatpush.msra.mxu0 0.0
        %697 = vmatpush.msra.mxu0 %v620
        %698 = vmatpush.msra.mxu0 %v612
        %699 = vmatpush.msra.mxu0 %v604
        %700 = vmatpush.msra.mxu0 %v596
        %701 = vmatmul.f32.gmra.mxu0 %v571
        %v702 = vpop.f32.mrf.mxu0
        %v703 = vadd.f32 0.0, %v702
        %704 = vdwg.mxu0
        %705 = vmatpush.msra.mxu0 0.0
        %706 = vmatpush.msra.mxu0 0.0
        %707 = vmatpush.msra.mxu0 0.0
        %708 = vmatpush.msra.mxu0 0.0
        %709 = vmatpush.msra.mxu0 0.0
        %710 = vmatpush.msra.mxu0 0.0
        %711 = vmatpush.msra.mxu0 0.0
        %712 = vmatpush.msra.mxu0 0.0
        %713 = vmatpush.msra.mxu0 0.0
        %714 = vmatpush.msra.mxu0 0.0
        %715 = vmatpush.msra.mxu0 0.0
        %716 = vmatpush.msra.mxu0 0.0
        %717 = vmatpush.msra.mxu0 %v621
        %718 = vmatpush.msra.mxu0 %v613
        %719 = vmatpush.msra.mxu0 %v605
        %720 = vmatpush.msra.mxu0 %v597
        %721 = vmatmul.f32.gmra.mxu0 %v571
        %v722 = vpop.f32.mrf.mxu0
        %v723 = vadd.f32 0.0, %v722
        %724 = vdwg.mxu0
        %725 = vmatpush.msra.mxu0 0.0
        %726 = vmatpush.msra.mxu0 0.0
        %727 = vmatpush.msra.mxu0 0.0
        %728 = vmatpush.msra.mxu0 0.0
        %729 = vmatpush.msra.mxu0 0.0
        %730 = vmatpush.msra.mxu0 0.0
        %731 = vmatpush.msra.mxu0 0.0
        %732 = vmatpush.msra.mxu0 0.0
        %733 = vmatpush.msra.mxu0 0.0
        %734 = vmatpush.msra.mxu0 0.0
        %735 = vmatpush.msra.mxu0 0.0
        %736 = vmatpush.msra.mxu0 0.0
        %737 = vmatpush.msra.mxu0 %v622
        %738 = vmatpush.msra.mxu0 %v614
        %739 = vmatpush.msra.mxu0 %v606
        %740 = vmatpush.msra.mxu0 %v598
        %741 = vmatmul.f32.gmra.mxu0 %v571
        %v742 = vpop.f32.mrf.mxu0
        %v743 = vadd.f32 0.0, %v742
        %744 = vdwg.mxu0
        %745 = vmatpush.msra.mxu0 0.0
        %746 = vmatpush.msra.mxu0 0.0
        %747 = vmatpush.msra.mxu0 0.0
        %748 = vmatpush.msra.mxu0 0.0
        %749 = vmatpush.msra.mxu0 0.0
        %750 = vmatpush.msra.mxu0 0.0
        %751 = vmatpush.msra.mxu0 0.0
        %752 = vmatpush.msra.mxu0 0.0
        %753 = vmatpush.msra.mxu0 0.0
        %754 = vmatpush.msra.mxu0 0.0
        %755 = vmatpush.msra.mxu0 0.0
        %756 = vmatpush.msra.mxu0 0.0
        %757 = vmatpush.msra.mxu0 %v623
        %758 = vmatpush.msra.mxu0 %v615
        %759 = vmatpush.msra.mxu0 %v607
        %760 = vmatpush.msra.mxu0 %v599
        %761 = vmatmul.f32.gmra.mxu0 %v571
        %v762 = vpop.f32.mrf.mxu0
        %v763 = vadd.f32 0.0, %v762
        %764 = vdwg.mxu0
        %765 = vmatpush.msra.mxu0 0.0
        %766 = vmatpush.msra.mxu0 0.0
        %767 = vmatpush.msra.mxu0 0.0
        %768 = vmatpush.msra.mxu0 0.0
        %769 = vmatpush.msra.mxu0 0.0
        %770 = vmatpush.msra.mxu0 0.0
        %771 = vmatpush.msra.mxu0 0.0
        %772 = vmatpush.msra.mxu0 0.0
        %773 = vmatpush.msra.mxu0 0.0
        %774 = vmatpush.msra.mxu0 0.0
        %775 = vmatpush.msra.mxu0 0.0
        %776 = vmatpush.msra.mxu0 0.0
        %777 = vmatpush.msra.mxu0 %v624
        %778 = vmatpush.msra.mxu0 %v616
        %779 = vmatpush.msra.mxu0 %v608
        %780 = vmatpush.msra.mxu0 %v600
        %781 = vmatmul.f32.gmra.mxu0 %v571
        %v782 = vpop.f32.mrf.mxu0
        %v783 = vadd.f32 0.0, %v782
        %784 = vdwg.mxu0
        %v785 = vmul.f32 %v526, %v643
        %v786 = vmul.f32 %v527, %v663
        %v787 = vmul.f32 %v528, %v683
        %v788 = vmul.f32 %v529, %v703
        %v789 = vmul.f32 %v530, %v723
        %v790 = vmul.f32 %v531, %v743
        %v791 = vmul.f32 %v532, %v763
        %v792 = vmul.f32 %v533, %v783
        %v793 = vld [vmem:[%s8] sm:$0xff]
        %v794 = vld [vmem:[%s8 + $0x8] sm:$0xff]
        %v795 = vld [vmem:[%s8 + $0x10] sm:$0xff]
        %v796 = vld [vmem:[%s8 + $0x18] sm:$0xff]
        %v797 = vld [vmem:[%s8 + $0x20] sm:$0xff]
        %v798 = vld [vmem:[%s8 + $0x28] sm:$0xff]
        %v799 = vld [vmem:[%s8 + $0x30] sm:$0xff]
        %v800 = vld [vmem:[%s8 + $0x38] sm:$0xff]
        %v801 = vld [vmem:[%s8 + $0x40] sm:$0xff]
        %v802 = vld [vmem:[%s8 + $0x48] sm:$0xff]
        %v803 = vld [vmem:[%s8 + $0x50] sm:$0xff]
        %v804 = vld [vmem:[%s8 + $0x58] sm:$0xff]
        %v805 = vld [vmem:[%s8 + $0x60] sm:$0xff]
        %v806 = vld [vmem:[%s8 + $0x68] sm:$0xff]
        %v807 = vld [vmem:[%s8 + $0x70] sm:$0xff]
        %v808 = vld [vmem:[%s8 + $0x78] sm:$0xff]
        %v809 = vld [vmem:[%s8 + $0x80] sm:$0xff]
        %v810 = vld [vmem:[%s8 + $0x88] sm:$0xff]
        %v811 = vld [vmem:[%s8 + $0x90] sm:$0xff]
        %v812 = vld [vmem:[%s8 + $0x98] sm:$0xff]
        %v813 = vld [vmem:[%s8 + $0xa0] sm:$0xff]
        %v814 = vld [vmem:[%s8 + $0xa8] sm:$0xff]
        %v815 = vld [vmem:[%s8 + $0xb0] sm:$0xff]
        %v816 = vld [vmem:[%s8 + $0xb8] sm:$0xff]
        %v817 = vld [vmem:[%s8 + $0xc0] sm:$0xff]
        %v818 = vld [vmem:[%s8 + $0xc8] sm:$0xff]
        %v819 = vld [vmem:[%s8 + $0xd0] sm:$0xff]
        %v820 = vld [vmem:[%s8 + $0xd8] sm:$0xff]
        %v821 = vld [vmem:[%s8 + $0xe0] sm:$0xff]
        %v822 = vld [vmem:[%s8 + $0xe8] sm:$0xff]
        %v823 = vld [vmem:[%s8 + $0xf0] sm:$0xff]
        %v824 = vld [vmem:[%s8 + $0xf8] sm:$0xff]
        %v825 = vld [vmem:[%s8 + $0x100] sm:$0xff]
        %v826 = vld [vmem:[%s8 + $0x108] sm:$0xff]
        %v827 = vld [vmem:[%s8 + $0x110] sm:$0xff]
        %v828 = vld [vmem:[%s8 + $0x118] sm:$0xff]
        %v829 = vld [vmem:[%s8 + $0x120] sm:$0xff]
        %v830 = vld [vmem:[%s8 + $0x128] sm:$0xff]
        %v831 = vld [vmem:[%s8 + $0x130] sm:$0xff]
        %v832 = vld [vmem:[%s8 + $0x138] sm:$0xff]
        %v833 = vld [vmem:[%s8 + $0x140] sm:$0xff]
        %v834 = vld [vmem:[%s8 + $0x148] sm:$0xff]
        %v835 = vld [vmem:[%s8 + $0x150] sm:$0xff]
        %v836 = vld [vmem:[%s8 + $0x158] sm:$0xff]
        %v837 = vld [vmem:[%s8 + $0x160] sm:$0xff]
        %v838 = vld [vmem:[%s8 + $0x168] sm:$0xff]
        %v839 = vld [vmem:[%s8 + $0x170] sm:$0xff]
        %v840 = vld [vmem:[%s8 + $0x178] sm:$0xff]
        %v841 = vld [vmem:[%s8 + $0x180] sm:$0xff]
        %v842 = vld [vmem:[%s8 + $0x188] sm:$0xff]
        %v843 = vld [vmem:[%s8 + $0x190] sm:$0xff]
        %v844 = vld [vmem:[%s8 + $0x198] sm:$0xff]
        %v845 = vld [vmem:[%s8 + $0x1a0] sm:$0xff]
        %v846 = vld [vmem:[%s8 + $0x1a8] sm:$0xff]
        %v847 = vld [vmem:[%s8 + $0x1b0] sm:$0xff]
        %v848 = vld [vmem:[%s8 + $0x1b8] sm:$0xff]
        %v849 = vld [vmem:[%s8 + $0x1c0] sm:$0xff]
        %v850 = vld [vmem:[%s8 + $0x1c8] sm:$0xff]
        %v851 = vld [vmem:[%s8 + $0x1d0] sm:$0xff]
        %v852 = vld [vmem:[%s8 + $0x1d8] sm:$0xff]
        %v853 = vld [vmem:[%s8 + $0x1e0] sm:$0xff]
        %v854 = vld [vmem:[%s8 + $0x1e8] sm:$0xff]
        %v855 = vld [vmem:[%s8 + $0x1f0] sm:$0xff]
        %v856 = vld [vmem:[%s8 + $0x1f8] sm:$0xff]
        %v857 = vld [vmem:[%s8 + $0x200] sm:$0xff]
        %v858 = vld [vmem:[%s8 + $0x208] sm:$0xff]
        %v859 = vld [vmem:[%s8 + $0x210] sm:$0xff]
        %v860 = vld [vmem:[%s8 + $0x218] sm:$0xff]
        %v861 = vld [vmem:[%s8 + $0x220] sm:$0xff]
        %v862 = vld [vmem:[%s8 + $0x228] sm:$0xff]
        %v863 = vld [vmem:[%s8 + $0x230] sm:$0xff]
        %v864 = vld [vmem:[%s8 + $0x238] sm:$0xff]
        %v865 = vld [vmem:[%s8 + $0x240] sm:$0xff]
        %v866 = vld [vmem:[%s8 + $0x248] sm:$0xff]
        %v867 = vld [vmem:[%s8 + $0x250] sm:$0xff]
        %v868 = vld [vmem:[%s8 + $0x258] sm:$0xff]
        %v869 = vld [vmem:[%s8 + $0x260] sm:$0xff]
        %v870 = vld [vmem:[%s8 + $0x268] sm:$0xff]
        %v871 = vld [vmem:[%s8 + $0x270] sm:$0xff]
        %v872 = vld [vmem:[%s8 + $0x278] sm:$0xff]
        %v873 = vld [vmem:[%s8 + $0x280] sm:$0xff]
        %v874 = vld [vmem:[%s8 + $0x288] sm:$0xff]
        %v875 = vld [vmem:[%s8 + $0x290] sm:$0xff]
        %v876 = vld [vmem:[%s8 + $0x298] sm:$0xff]
        %v877 = vld [vmem:[%s8 + $0x2a0] sm:$0xff]
        %v878 = vld [vmem:[%s8 + $0x2a8] sm:$0xff]
        %v879 = vld [vmem:[%s8 + $0x2b0] sm:$0xff]
        %v880 = vld [vmem:[%s8 + $0x2b8] sm:$0xff]
        %v881 = vld [vmem:[%s8 + $0x2c0] sm:$0xff]
        %v882 = vld [vmem:[%s8 + $0x2c8] sm:$0xff]
        %v883 = vld [vmem:[%s8 + $0x2d0] sm:$0xff]
        %v884 = vld [vmem:[%s8 + $0x2d8] sm:$0xff]
        %v885 = vld [vmem:[%s8 + $0x2e0] sm:$0xff]
        %v886 = vld [vmem:[%s8 + $0x2e8] sm:$0xff]
        %v887 = vld [vmem:[%s8 + $0x2f0] sm:$0xff]
        %v888 = vld [vmem:[%s8 + $0x2f8] sm:$0xff]
        %v889 = vld [vmem:[%s8 + $0x300] sm:$0xff]
        %v890 = vld [vmem:[%s8 + $0x308] sm:$0xff]
        %v891 = vld [vmem:[%s8 + $0x310] sm:$0xff]
        %v892 = vld [vmem:[%s8 + $0x318] sm:$0xff]
        %v893 = vld [vmem:[%s8 + $0x320] sm:$0xff]
        %v894 = vld [vmem:[%s8 + $0x328] sm:$0xff]
        %v895 = vld [vmem:[%s8 + $0x330] sm:$0xff]
        %v896 = vld [vmem:[%s8 + $0x338] sm:$0xff]
        %v897 = vld [vmem:[%s8 + $0x340] sm:$0xff]
        %v898 = vld [vmem:[%s8 + $0x348] sm:$0xff]
        %v899 = vld [vmem:[%s8 + $0x350] sm:$0xff]
        %v900 = vld [vmem:[%s8 + $0x358] sm:$0xff]
        %v901 = vld [vmem:[%s8 + $0x360] sm:$0xff]
        %v902 = vld [vmem:[%s8 + $0x368] sm:$0xff]
        %v903 = vld [vmem:[%s8 + $0x370] sm:$0xff]
        %v904 = vld [vmem:[%s8 + $0x378] sm:$0xff]
        %v905 = vld [vmem:[%s8 + $0x380] sm:$0xff]
        %v906 = vld [vmem:[%s8 + $0x388] sm:$0xff]
        %v907 = vld [vmem:[%s8 + $0x390] sm:$0xff]
        %v908 = vld [vmem:[%s8 + $0x398] sm:$0xff]
        %v909 = vld [vmem:[%s8 + $0x3a0] sm:$0xff]
        %v910 = vld [vmem:[%s8 + $0x3a8] sm:$0xff]
        %v911 = vld [vmem:[%s8 + $0x3b0] sm:$0xff]
        %v912 = vld [vmem:[%s8 + $0x3b8] sm:$0xff]
        %v913 = vld [vmem:[%s8 + $0x3c0] sm:$0xff]
        %v914 = vld [vmem:[%s8 + $0x3c8] sm:$0xff]
        %v915 = vld [vmem:[%s8 + $0x3d0] sm:$0xff]
        %v916 = vld [vmem:[%s8 + $0x3d8] sm:$0xff]
        %v917 = vld [vmem:[%s8 + $0x3e0] sm:$0xff]
        %v918 = vld [vmem:[%s8 + $0x3e8] sm:$0xff]
        %v919 = vld [vmem:[%s8 + $0x3f0] sm:$0xff]
        %v920 = vld [vmem:[%s8 + $0x3f8] sm:$0xff]
        %921 = vmatpush.msra.mxu0 %v808
        %922 = vmatpush.msra.mxu0 %v807
        %923 = vmatpush.msra.mxu0 %v806
        %924 = vmatpush.msra.mxu0 %v805
        %925 = vmatpush.msra.mxu0 %v804
        %926 = vmatpush.msra.mxu0 %v803
        %927 = vmatpush.msra.mxu0 %v802
        %928 = vmatpush.msra.mxu0 %v801
        %929 = vmatpush.msra.mxu0 %v800
        %930 = vmatpush.msra.mxu0 %v799
        %931 = vmatpush.msra.mxu0 %v798
        %932 = vmatpush.msra.mxu0 %v797
        %933 = vmatpush.msra.mxu0 %v796
        %934 = vmatpush.msra.mxu0 %v795
        %935 = vmatpush.msra.mxu0 %v794
        %936 = vmatpush.msra.mxu0 %v793
        %937 = vmatmul.f32.gmra.mxu0 %v785
        %v938 = vpop.f32.mrf.mxu0
        %v939 = vadd.f32 0.0, %v938
        %940 = vdwg.mxu0
        %941 = vmatpush.msra.mxu0 %v824
        %942 = vmatpush.msra.mxu0 %v823
        %943 = vmatpush.msra.mxu0 %v822
        %944 = vmatpush.msra.mxu0 %v821
        %945 = vmatpush.msra.mxu0 %v820
        %946 = vmatpush.msra.mxu0 %v819
        %947 = vmatpush.msra.mxu0 %v818
        %948 = vmatpush.msra.mxu0 %v817
        %949 = vmatpush.msra.mxu0 %v816
        %950 = vmatpush.msra.mxu0 %v815
        %951 = vmatpush.msra.mxu0 %v814
        %952 = vmatpush.msra.mxu0 %v813
        %953 = vmatpush.msra.mxu0 %v812
        %954 = vmatpush.msra.mxu0 %v811
        %955 = vmatpush.msra.mxu0 %v810
        %956 = vmatpush.msra.mxu0 %v809
        %957 = vmatmul.f32.gmra.mxu0 %v786
        %v958 = vpop.f32.mrf.mxu0
        %v959 = vadd.f32 %v939, %v958
        %960 = vdwg.mxu0
        %961 = vmatpush.msra.mxu0 %v840
        %962 = vmatpush.msra.mxu0 %v839
        %963 = vmatpush.msra.mxu0 %v838
        %964 = vmatpush.msra.mxu0 %v837
        %965 = vmatpush.msra.mxu0 %v836
        %966 = vmatpush.msra.mxu0 %v835
        %967 = vmatpush.msra.mxu0 %v834
        %968 = vmatpush.msra.mxu0 %v833
        %969 = vmatpush.msra.mxu0 %v832
        %970 = vmatpush.msra.mxu0 %v831
        %971 = vmatpush.msra.mxu0 %v830
        %972 = vmatpush.msra.mxu0 %v829
        %973 = vmatpush.msra.mxu0 %v828
        %974 = vmatpush.msra.mxu0 %v827
        %975 = vmatpush.msra.mxu0 %v826
        %976 = vmatpush.msra.mxu0 %v825
        %977 = vmatmul.f32.gmra.mxu0 %v787
        %v978 = vpop.f32.mrf.mxu0
        %v979 = vadd.f32 %v959, %v978
        %980 = vdwg.mxu0
        %981 = vmatpush.msra.mxu0 %v856
        %982 = vmatpush.msra.mxu0 %v855
        %983 = vmatpush.msra.mxu0 %v854
        %984 = vmatpush.msra.mxu0 %v853
        %985 = vmatpush.msra.mxu0 %v852
        %986 = vmatpush.msra.mxu0 %v851
        %987 = vmatpush.msra.mxu0 %v850
        %988 = vmatpush.msra.mxu0 %v849
        %989 = vmatpush.msra.mxu0 %v848
        %990 = vmatpush.msra.mxu0 %v847
        %991 = vmatpush.msra.mxu0 %v846
        %992 = vmatpush.msra.mxu0 %v845
        %993 = vmatpush.msra.mxu0 %v844
        %994 = vmatpush.msra.mxu0 %v843
        %995 = vmatpush.msra.mxu0 %v842
        %996 = vmatpush.msra.mxu0 %v841
        %997 = vmatmul.f32.gmra.mxu0 %v788
        %v998 = vpop.f32.mrf.mxu0
        %v999 = vadd.f32 %v979, %v998
        %1000 = vdwg.mxu0
        %1001 = vmatpush.msra.mxu0 %v872
        %1002 = vmatpush.msra.mxu0 %v871
        %1003 = vmatpush.msra.mxu0 %v870
        %1004 = vmatpush.msra.mxu0 %v869
        %1005 = vmatpush.msra.mxu0 %v868
        %1006 = vmatpush.msra.mxu0 %v867
        %1007 = vmatpush.msra.mxu0 %v866
        %1008 = vmatpush.msra.mxu0 %v865
        %1009 = vmatpush.msra.mxu0 %v864
        %1010 = vmatpush.msra.mxu0 %v863
        %1011 = vmatpush.msra.mxu0 %v862
        %1012 = vmatpush.msra.mxu0 %v861
        %1013 = vmatpush.msra.mxu0 %v860
        %1014 = vmatpush.msra.mxu0 %v859
        %1015 = vmatpush.msra.mxu0 %v858
        %1016 = vmatpush.msra.mxu0 %v857
        %1017 = vmatmul.f32.gmra.mxu0 %v789
        %v1018 = vpop.f32.mrf.mxu0
        %v1019 = vadd.f32 %v999, %v1018
        %1020 = vdwg.mxu0
        %1021 = vmatpush.msra.mxu0 %v888
        %1022 = vmatpush.msra.mxu0 %v887
        %1023 = vmatpush.msra.mxu0 %v886
        %1024 = vmatpush.msra.mxu0 %v885
        %1025 = vmatpush.msra.mxu0 %v884
        %1026 = vmatpush.msra.mxu0 %v883
        %1027 = vmatpush.msra.mxu0 %v882
        %1028 = vmatpush.msra.mxu0 %v881
        %1029 = vmatpush.msra.mxu0 %v880
        %1030 = vmatpush.msra.mxu0 %v879
        %1031 = vmatpush.msra.mxu0 %v878
        %1032 = vmatpush.msra.mxu0 %v877
        %1033 = vmatpush.msra.mxu0 %v876
        %1034 = vmatpush.msra.mxu0 %v875
        %1035 = vmatpush.msra.mxu0 %v874
        %1036 = vmatpush.msra.mxu0 %v873
        %1037 = vmatmul.f32.gmra.mxu0 %v790
        %v1038 = vpop.f32.mrf.mxu0
        %v1039 = vadd.f32 %v1019, %v1038
        %1040 = vdwg.mxu0
        %1041 = vmatpush.msra.mxu0 %v904
        %1042 = vmatpush.msra.mxu0 %v903
        %1043 = vmatpush.msra.mxu0 %v902
        %1044 = vmatpush.msra.mxu0 %v901
        %1045 = vmatpush.msra.mxu0 %v900
        %1046 = vmatpush.msra.mxu0 %v899
        %1047 = vmatpush.msra.mxu0 %v898
        %1048 = vmatpush.msra.mxu0 %v897
        %1049 = vmatpush.msra.mxu0 %v896
        %1050 = vmatpush.msra.mxu0 %v895
        %1051 = vmatpush.msra.mxu0 %v894
        %1052 = vmatpush.msra.mxu0 %v893
        %1053 = vmatpush.msra.mxu0 %v892
        %1054 = vmatpush.msra.mxu0 %v891
        %1055 = vmatpush.msra.mxu0 %v890
        %1056 = vmatpush.msra.mxu0 %v889
        %1057 = vmatmul.f32.gmra.mxu0 %v791
        %v1058 = vpop.f32.mrf.mxu0
        %v1059 = vadd.f32 %v1039, %v1058
        %1060 = vdwg.mxu0
        %1061 = vmatpush.msra.mxu0 %v920
        %1062 = vmatpush.msra.mxu0 %v919
        %1063 = vmatpush.msra.mxu0 %v918
        %1064 = vmatpush.msra.mxu0 %v917
        %1065 = vmatpush.msra.mxu0 %v916
        %1066 = vmatpush.msra.mxu0 %v915
        %1067 = vmatpush.msra.mxu0 %v914
        %1068 = vmatpush.msra.mxu0 %v913
        %1069 = vmatpush.msra.mxu0 %v912
        %1070 = vmatpush.msra.mxu0 %v911
        %1071 = vmatpush.msra.mxu0 %v910
        %1072 = vmatpush.msra.mxu0 %v909
        %1073 = vmatpush.msra.mxu0 %v908
        %1074 = vmatpush.msra.mxu0 %v907
        %1075 = vmatpush.msra.mxu0 %v906
        %1076 = vmatpush.msra.mxu0 %v905
        %1077 = vmatmul.f32.gmra.mxu0 %v792
        %v1078 = vpop.f32.mrf.mxu0
        %v1079 = vadd.f32 %v1059, %v1078
        %1080 = vdwg.mxu0
        %v1081 = vadd.f32 %v563, %v591
        %v1082 = vadd.f32 %v1081, %v1079
        %v1083 = vtanh.pop %v1082
        %1084 = vst.msk [vmem:[%s494] sm:$0xff] %vm569, %v1083
        %v1085 = vld [vmem:[%s9] sm:$0xff]
        %v1086 = vld [vmem:[%s9 + $0x8] sm:$0xff]
        %v1087 = vld [vmem:[%s9 + $0x10] sm:$0xff]
        %v1088 = vld [vmem:[%s9 + $0x18] sm:$0xff]
        %v1089 = vld [vmem:[%s10] sm:$0x1]
        %v1091 = vperm.slane %v1089, 0
        %v1094 = vsel %vm569, %v1083, 0
        %1096 = vmatpush.msra.mxu0 0.0
        %1097 = vmatpush.msra.mxu0 0.0
        %1098 = vmatpush.msra.mxu0 0.0
        %1099 = vmatpush.msra.mxu0 0.0
        %1100 = vmatpush.msra.mxu0 0.0
        %1101 = vmatpush.msra.mxu0 0.0
        %1102 = vmatpush.msra.mxu0 0.0
        %1103 = vmatpush.msra.mxu0 0.0
        %1104 = vmatpush.msra.mxu0 0.0
        %1105 = vmatpush.msra.mxu0 0.0
        %1106 = vmatpush.msra.mxu0 0.0
        %1107 = vmatpush.msra.mxu0 0.0
        %1108 = vmatpush.msra.mxu0 %v1088
        %1109 = vmatpush.msra.mxu0 %v1087
        %1110 = vmatpush.msra.mxu0 %v1086
        %1111 = vmatpush.msra.mxu0 %v1085
        %1112 = vmatmul.f32.gmra.mxu0 %v1094
        %v1113 = vpop.f32.mrf.mxu0
        %v1114 = vadd.f32 %v1091, %v1113
        %1115 = vdwg.mxu0
        %1116 = vst [vmem:[%s518] sm:$0xff] %v1114
        %v1117 = vstv %s534
        %v1118 = vmul.f32 %v1117, %v1083
        %v1119 = vld [vmem:[%s7] sm:$0xff]
        %v1120 = vld [vmem:[%s7 + $0x8] sm:$0xff]
        %v1121 = vld [vmem:[%s7 + $0x10] sm:$0xff]
        %v1122 = vld [vmem:[%s7 + $0x18] sm:$0xff]
        %v1123 = vld [vmem:[%s7 + $0x20] sm:$0xff]
        %v1124 = vld [vmem:[%s7 + $0x28] sm:$0xff]
        %v1125 = vld [vmem:[%s7 + $0x30] sm:$0xff]
        %v1126 = vld [vmem:[%s7 + $0x38] sm:$0xff]
        %v1127 = vld [vmem:[%s7 + $0x40] sm:$0xff]
        %v1128 = vld [vmem:[%s7 + $0x48] sm:$0xff]
        %v1129 = vld [vmem:[%s7 + $0x50] sm:$0xff]
        %v1130 = vld [vmem:[%s7 + $0x58] sm:$0xff]
        %v1131 = vld [vmem:[%s7 + $0x60] sm:$0xff]
        %v1132 = vld [vmem:[%s7 + $0x68] sm:$0xff]
        %v1133 = vld [vmem:[%s7 + $0x70] sm:$0xff]
        %v1134 = vld [vmem:[%s7 + $0x78] sm:$0xff]
        %v1135 = vld [vmem:[%s7 + $0x80] sm:$0xff]
        %v1136 = vld [vmem:[%s7 + $0x88] sm:$0xff]
        %v1137 = vld [vmem:[%s7 + $0x90] sm:$0xff]
        %v1138 = vld [vmem:[%s7 + $0x98] sm:$0xff]
        %v1139 = vld [vmem:[%s7 + $0xa0] sm:$0xff]
        %v1140 = vld [vmem:[%s7 + $0xa8] sm:$0xff]
        %v1141 = vld [vmem:[%s7 + $0xb0] sm:$0xff]
        %v1142 = vld [vmem:[%s7 + $0xb8] sm:$0xff]
        %v1143 = vld [vmem:[%s7 + $0xc0] sm:$0xff]
        %v1144 = vld [vmem:[%s7 + $0xc8] sm:$0xff]
        %v1145 = vld [vmem:[%s7 + $0xd0] sm:$0xff]
        %v1146 = vld [vmem:[%s7 + $0xd8] sm:$0xff]
        %v1147 = vld [vmem:[%s7 + $0xe0] sm:$0xff]
        %v1148 = vld [vmem:[%s7 + $0xe8] sm:$0xff]
        %v1149 = vld [vmem:[%s7 + $0xf0] sm:$0xff]
        %v1150 = vld [vmem:[%s7 + $0xf8] sm:$0xff]
        %v1152 = vsel %vm569, %v1118, 0
        %1154 = vmatpush.msra.mxu0 0.0
        %1155 = vmatpush.msra.mxu0 0.0
        %1156 = vmatpush.msra.mxu0 0.0
        %1157 = vmatpush.msra.mxu0 0.0
        %1158 = vmatpush.msra.mxu0 0.0
        %1159 = vmatpush.msra.mxu0 0.0
        %1160 = vmatpush.msra.mxu0 0.0
        %1161 = vmatpush.msra.mxu0 0.0
        %1162 = vmatpush.msra.mxu0 0.0
        %1163 = vmatpush.msra.mxu0 0.0
        %1164 = vmatpush.msra.mxu0 0.0
        %1165 = vmatpush.msra.mxu0 0.0
        %1166 = vmatpush.msra.mxu0 %v1143
        %1167 = vmatpush.msra.mxu0 %v1135
        %1168 = vmatpush.msra.mxu0 %v1127
        %1169 = vmatpush.msra.mxu0 %v1119
        %1170 = vmatmul.f32.gmra.mxu0 %v1152
        %v1171 = vpop.f32.mrf.mxu0
        %v1172 = vadd.f32 0.0, %v1171
        %1173 = vdwg.mxu0
        %1174 = vmatpush.msra.mxu0 0.0
        %1175 = vmatpush.msra.mxu0 0.0
        %1176 = vmatpush.msra.mxu0 0.0
        %1177 = vmatpush.msra.mxu0 0.0
        %1178 = vmatpush.msra.mxu0 0.0
        %1179 = vmatpush.msra.mxu0 0.0
        %1180 = vmatpush.msra.mxu0 0.0
        %1181 = vmatpush.msra.mxu0 0.0
        %1182 = vmatpush.msra.mxu0 0.0
        %1183 = vmatpush.msra.mxu0 0.0
        %1184 = vmatpush.msra.mxu0 0.0
        %1185 = vmatpush.msra.mxu0 0.0
        %1186 = vmatpush.msra.mxu0 %v1144
        %1187 = vmatpush.msra.mxu0 %v1136
        %1188 = vmatpush.msra.mxu0 %v1128
        %1189 = vmatpush.msra.mxu0 %v1120
        %1190 = vmatmul.f32.gmra.mxu0 %v1152
        %v1191 = vpop.f32.mrf.mxu0
        %v1192 = vadd.f32 0.0, %v1191
        %1193 = vdwg.mxu0
        %1194 = vmatpush.msra.mxu0 0.0
        %1195 = vmatpush.msra.mxu0 0.0
        %1196 = vmatpush.msra.mxu0 0.0
        %1197 = vmatpush.msra.mxu0 0.0
        %1198 = vmatpush.msra.mxu0 0.0
        %1199 = vmatpush.msra.mxu0 0.0
        %1200 = vmatpush.msra.mxu0 0.0
        %1201 = vmatpush.msra.mxu0 0.0
        %1202 = vmatpush.msra.mxu0 0.0
        %1203 = vmatpush.msra.mxu0 0.0
        %1204 = vmatpush.msra.mxu0 0.0
        %1205 = vmatpush.msra.mxu0 0.0
        %1206 = vmatpush.msra.mxu0 %v1145
        %1207 = vmatpush.msra.mxu0 %v1137
        %1208 = vmatpush.msra.mxu0 %v1129
        %1209 = vmatpush.msra.mxu0 %v1121
        %1210 = vmatmul.f32.gmra.mxu0 %v1152
        %v1211 = vpop.f32.mrf.mxu0
        %v1212 = vadd.f32 0.0, %v1211
        %1213 = vdwg.mxu0
        %1214 = vmatpush.msra.mxu0 0.0
        %1215 = vmatpush.msra.mxu0 0.0
        %1216 = vmatpush.msra.mxu0 0.0
        %1217 = vmatpush.msra.mxu0 0.0
        %1218 = vmatpush.msra.mxu0 0.0
        %1219 = vmatpush.msra.mxu0 0.0
        %1220 = vmatpush.msra.mxu0 0.0
        %1221 = vmatpush.msra.mxu0 0.0
        %1222 = vmatpush.msra.mxu0 0.0
        %1223 = vmatpush.msra.mxu0 0.0
        %1224 = vmatpush.msra.mxu0 0.0
        %1225 = vmatpush.msra.mxu0 0.0
        %1226 = vmatpush.msra.mxu0 %v1146
        %1227 = vmatpush.msra.mxu0 %v1138
        %1228 = vmatpush.msra.mxu0 %v1130
        %1229 = vmatpush.msra.mxu0 %v1122
        %1230 = vmatmul.f32.gmra.mxu0 %v1152
        %v1231 = vpop.f32.mrf.mxu0
        %v1232 = vadd.f32 0.0, %v1231
        %1233 = vdwg.mxu0
        %1234 = vmatpush.msra.mxu0 0.0
        %1235 = vmatpush.msra.mxu0 0.0
        %1236 = vmatpush.msra.mxu0 0.0
        %1237 = vmatpush.msra.mxu0 0.0
        %1238 = vmatpush.msra.mxu0 0.0
        %1239 = vmatpush.msra.mxu0 0.0
        %1240 = vmatpush.msra.mxu0 0.0
        %1241 = vmatpush.msra.mxu0 0.0
        %1242 = vmatpush.msra.mxu0 0.0
        %1243 = vmatpush.msra.mxu0 0.0
        %1244 = vmatpush.msra.mxu0 0.0
        %1245 = vmatpush.msra.mxu0 0.0
        %1246 = vmatpush.msra.mxu0 %v1147
        %1247 = vmatpush.msra.mxu0 %v1139
        %1248 = vmatpush.msra.mxu0 %v1131
        %1249 = vmatpush.msra.mxu0 %v1123
        %1250 = vmatmul.f32.gmra.mxu0 %v1152
        %v1251 = vpop.f32.mrf.mxu0
        %v1252 = vadd.f32 0.0, %v1251
        %1253 = vdwg.mxu0
        %1254 = vmatpush.msra.mxu0 0.0
        %1255 = vmatpush.msra.mxu0 0.0
        %1256 = vmatpush.msra.mxu0 0.0
        %1257 = vmatpush.msra.mxu0 0.0
        %1258 = vmatpush.msra.mxu0 0.0
        %1259 = vmatpush.msra.mxu0 0.0
        %1260 = vmatpush.msra.mxu0 0.0
        %1261 = vmatpush.msra.mxu0 0.0
        %1262 = vmatpush.msra.mxu0 0.0
        %1263 = vmatpush.msra.mxu0 0.0
        %1264 = vmatpush.msra.mxu0 0.0
        %1265 = vmatpush.msra.mxu0 0.0
        %1266 = vmatpush.msra.mxu0 %v1148
        %1267 = vmatpush.msra.mxu0 %v1140
        %1268 = vmatpush.msra.mxu0 %v1132
        %1269 = vmatpush.msra.mxu0 %v1124
        %1270 = vmatmul.f32.gmra.mxu0 %v1152
        %v1271 = vpop.f32.mrf.mxu0
        %v1272 = vadd.f32 0.0, %v1271
        %1273 = vdwg.mxu0
        %1274 = vmatpush.msra.mxu0 0.0
        %1275 = vmatpush.msra.mxu0 0.0
        %1276 = vmatpush.msra.mxu0 0.0
        %1277 = vmatpush.msra.mxu0 0.0
        %1278 = vmatpush.msra.mxu0 0.0
        %1279 = vmatpush.msra.mxu0 0.0
        %1280 = vmatpush.msra.mxu0 0.0
        %1281 = vmatpush.msra.mxu0 0.0
        %1282 = vmatpush.msra.mxu0 0.0
        %1283 = vmatpush.msra.mxu0 0.0
        %1284 = vmatpush.msra.mxu0 0.0
        %1285 = vmatpush.msra.mxu0 0.0
        %1286 = vmatpush.msra.mxu0 %v1149
        %1287 = vmatpush.msra.mxu0 %v1141
        %1288 = vmatpush.msra.mxu0 %v1133
        %1289 = vmatpush.msra.mxu0 %v1125
        %1290 = vmatmul.f32.gmra.mxu0 %v1152
        %v1291 = vpop.f32.mrf.mxu0
        %v1292 = vadd.f32 0.0, %v1291
        %1293 = vdwg.mxu0
        %1294 = vmatpush.msra.mxu0 0.0
        %1295 = vmatpush.msra.mxu0 0.0
        %1296 = vmatpush.msra.mxu0 0.0
        %1297 = vmatpush.msra.mxu0 0.0
        %1298 = vmatpush.msra.mxu0 0.0
        %1299 = vmatpush.msra.mxu0 0.0
        %1300 = vmatpush.msra.mxu0 0.0
        %1301 = vmatpush.msra.mxu0 0.0
        %1302 = vmatpush.msra.mxu0 0.0
        %1303 = vmatpush.msra.mxu0 0.0
        %1304 = vmatpush.msra.mxu0 0.0
        %1305 = vmatpush.msra.mxu0 0.0
        %1306 = vmatpush.msra.mxu0 %v1150
        %1307 = vmatpush.msra.mxu0 %v1142
        %1308 = vmatpush.msra.mxu0 %v1134
        %1309 = vmatpush.msra.mxu0 %v1126
        %1310 = vmatmul.f32.gmra.mxu0 %v1152
        %v1311 = vpop.f32.mrf.mxu0
        %v1312 = vadd.f32 0.0, %v1311
        %1313 = vdwg.mxu0
        %v1314 = vmul.f32 %v1172, %v643
        %v1315 = vmul.f32 %v1192, %v663
        %v1316 = vmul.f32 %v1212, %v683
        %v1317 = vmul.f32 %v1232, %v703
        %v1318 = vmul.f32 %v1252, %v723
        %v1319 = vmul.f32 %v1272, %v743
        %v1320 = vmul.f32 %v1292, %v763
        %v1321 = vmul.f32 %v1312, %v783
        %v1322 = vadd.f32 %v526, %v1314
        %v1323 = vadd.f32 %v527, %v1315
        %v1324 = vadd.f32 %v528, %v1316
        %v1325 = vadd.f32 %v529, %v1317
        %v1326 = vadd.f32 %v530, %v1318
        %v1327 = vadd.f32 %v531, %v1319
        %v1328 = vadd.f32 %v532, %v1320
        %v1329 = vadd.f32 %v533, %v1321
        %v1330 = vmax.f32 %v1322, -1.0
        %v1331 = vmax.f32 %v1323, -1.0
        %v1332 = vmax.f32 %v1324, -1.0
        %v1333 = vmax.f32 %v1325, -1.0
        %v1334 = vmax.f32 %v1326, -1.0
        %v1335 = vmax.f32 %v1327, -1.0
        %v1336 = vmax.f32 %v1328, -1.0
        %v1337 = vmax.f32 %v1329, -1.0
        %v1338 = vmin.f32 %v1330, 1.0
        %v1339 = vmin.f32 %v1331, 1.0
        %v1340 = vmin.f32 %v1332, 1.0
        %v1341 = vmin.f32 %v1333, 1.0
        %v1342 = vmin.f32 %v1334, 1.0
        %v1343 = vmin.f32 %v1335, 1.0
        %v1344 = vmin.f32 %v1336, 1.0
        %v1345 = vmin.f32 %v1337, 1.0
        %1346 = vst [vmem:[%s523] sm:$0xff] %v1338
        %1347 = vst [vmem:[%s523 + $0x8] sm:$0xff] %v1339
        %1348 = vst [vmem:[%s523 + $0x10] sm:$0xff] %v1340
        %1349 = vst [vmem:[%s523 + $0x18] sm:$0xff] %v1341
        %1350 = vst [vmem:[%s523 + $0x20] sm:$0xff] %v1342
        %1351 = vst [vmem:[%s523 + $0x28] sm:$0xff] %v1343
        %1352 = vst [vmem:[%s523 + $0x30] sm:$0xff] %v1344
        %1353 = vst [vmem:[%s523 + $0x38] sm:$0xff] %v1345
        %p1354 = scmp.lt.s32.totalorder %s30, 1
        %s1355 = scalar_select %p1354, %s30, 1
        %s1356 = smul.addr %s1355, 8
        %s1357 = scalar_lea.vmem %s12, %s1356
        %s1358 = sand.u32 %s331, 1
        %s1359 = scalar_lea.sflag [#allocation4], %s1358
        %s1360 = sand.u32 %s331, 1
        %s1361 = smul.addr %s1360, 8
        %s1362 = scalar_lea.vmem [#allocation3], %s1361
        %p1363 = scmp.lt.s32.totalorder %s30, 1
        %s1364 = scalar_select %p1363, %s30, 1
        %s1365 = smul.addr %s1364, 8
        %s1366 = smul.addr %s1365, 8
        %s1367 = scalar_lea.vmem %s14, %s1366
        // Predicated region
        $region69: #{plastic_rnn_step.1} parent=67 // pred_check
          %p1368 = pneg %p315
        $region70: #{plastic_rnn_step.1} parent=67 // pred_check_branch
          %1370 = sbr.rel (%p1368) target = $region72
        $region71: #{plastic_rnn_step.1} parent=67 // pred_region
          _
        $region72: #{plastic_rnn_step.1} parent=67 // pred_fallthru
          _
        // Predicated region
        $region73: #{plastic_rnn_step.1} parent=67 // pred_check
          %p1371 = pneg %p341
        $region74: #{plastic_rnn_step.1} parent=67 // pred_check_branch
          %1373 = sbr.rel (%p1371) target = $region76
        $region75: #{plastic_rnn_step.1} parent=67 // pred_region
          %1375 = vsyncadd %s1359, 0
          %s1376 = smul.addr %s30, 8
          %s1377 = scalar_lea.hbm %s13, %s1376
          %s1379 = sshll.u32 %s1362, 4
          %s1380 = int_to_ptr.vmem [resolvable:$true] %s1379
          %s1381 = sshll.u32 %s1377, 4
          %s1382 = int_to_ptr.hbm [resolvable:$true] %s1381
          %1384 = dma.vmem_to_hbm [thread:$0]  %s1380, 128, %s1382, %s1359
        $region76: #{plastic_rnn_step.1} parent=67 // pred_fallthru
          _
        // Predicated region
        $region77: #{plastic_rnn_step.1} parent=67 // pred_check
          %p1385 = pneg %p367
        $region78: #{plastic_rnn_step.1} parent=67 // pred_check_branch
          %1387 = sbr.rel (%p1385) target = $region80
        $region79: #{plastic_rnn_step.1} parent=67 // pred_region
          _
        $region80: #{plastic_rnn_step.1} parent=67 // pred_fallthru
          _
      $region68: #{plastic_rnn_step.1} parent=5 // pred_fallthru
        _
      %p1388 = scmp.le.s32.totalorder 2, %s25
      // Predicated region
      $region81: #{plastic_rnn_step.1} parent=5 // pred_check
        %p1389 = pneg %p1388
      $region82: #{plastic_rnn_step.1} parent=5 // pred_check_branch
        %1391 = sbr.rel (%p1389) target = $region84
      $region83: #{plastic_rnn_step.1} parent=5 // pred_region
        %s1392 = ssub.s32 %s25, 2
        // Predicated region
        $region85: #{plastic_rnn_step.1} parent=83 // pred_check
          %p1393 = pneg %p321
        $region86: #{plastic_rnn_step.1} parent=83 // pred_check_branch
          %1395 = sbr.rel (%p1393) target = $region88
        $region87: #{plastic_rnn_step.1} parent=83 // pred_region
          %p1396 = scmp.lt.s32.totalorder %s31, 1
          %s1397 = scalar_select %p1396, %s31, 1
          %s1398 = smul.addr %s1397, 8
          %s1399 = scalar_lea.vmem %s12, %s1398
        $region88: #{plastic_rnn_step.1} parent=83 // pred_fallthru
          _
        // Predicated region
        $region89: #{plastic_rnn_step.1} parent=83 // pred_check
          %p1400 = pneg %p347
        $region90: #{plastic_rnn_step.1} parent=83 // pred_check_branch
          %1402 = sbr.rel (%p1400) target = $region92
        $region91: #{plastic_rnn_step.1} parent=83 // pred_region
          %s1403 = sand.u32 %s332, 1
          %s1404 = scalar_lea.sflag [#allocation4], %s1403
          %s1405 = sand.u32 %s332, 1
          %s1406 = smul.addr %s1405, 8
          %s1407 = scalar_lea.vmem [#allocation3], %s1406
          %1409 = dma.done %s1404, 128
        $region92: #{plastic_rnn_step.1} parent=83 // pred_fallthru
          _
        // Predicated region
        $region93: #{plastic_rnn_step.1} parent=83 // pred_check
          %p1410 = pneg %p373
        $region94: #{plastic_rnn_step.1} parent=83 // pred_check_branch
          %1412 = sbr.rel (%p1410) target = $region96
        $region95: #{plastic_rnn_step.1} parent=83 // pred_region
          %p1413 = scmp.lt.s32.totalorder %s31, 1
          %s1414 = scalar_select %p1413, %s31, 1
          %s1415 = smul.addr %s1414, 8
          %s1416 = smul.addr %s1415, 8
          %s1417 = scalar_lea.vmem %s14, %s1416
        $region96: #{plastic_rnn_step.1} parent=83 // pred_fallthru
          _
      $region84: #{plastic_rnn_step.1} parent=5 // pred_fallthru
        _
    $region6: #{plastic_rnn_step.1} parent=1 // loop_footer
      %s29 = sadd.s32 1, %s25
    $region7: #{plastic_rnn_step.1} parent=1 // loop_footer_branch
      %24 = sbr.rel target = $region3
    $region8: #{plastic_rnn_step.1} parent=1 // loop_exit
      _
    %1418 = vsyncpa [#allocation4], 1
    %s1419 = scalar_lea.sflag [#allocation4], 1
    %1420 = vsyncpa %s1419, 1

</llo_original>
